<compile_context>
chip_gen: v5e
topology: v5e:2x2
jax: 0.10.0
libtpu: 0.0.40
codegen_flags: <defaults>
</compile_context>

<pallas_src>
import math

import numpy as np
import jax
import jax.numpy as jnp
from jax.experimental import pallas as pl
from jax.experimental.pallas import tpu as pltpu


def _gelu(x):
    # TODO(synk): torch nn.GELU defaults to exact erf; tanh-approx GELU used for
    # guaranteed Mosaic lowering (difference ~1e-3).
    return jax.nn.gelu(x, approximate=True)


def _conv_im2col(y, w_ref, b_ref, k):
    """Stride-1 'valid' Conv1d as ONE matmul.

    y (Lin, Cin) f32, w_ref (K*Cin, Cout) bf16, b_ref (1, Cout) f32.
    Patches are built by concatenating the K shifted slices along the lane axis so the
    contraction dim is K*Cin (one wide MXU push instead of K tiny ones).
    """
    lout = y.shape[0] - k + 1
    patches = jnp.concatenate([y[j:j + lout, :] for j in range(k)], axis=1)
    return jnp.dot(patches.astype(jnp.bfloat16), w_ref[...],
                   preferred_element_type=jnp.float32) + b_ref[...]


def _cnn_kernel(p_ref,
                w1_ref, b1_ref, w2_ref, b2_ref, w3_ref, b3_ref,
                w4_ref, b4_ref, w5_ref, b5_ref, pool_ref,
                l1w_ref, l1b_ref, l2w_ref, l2b_ref, l3w_ref, l3b_ref,
                out_ref):
    bb_n = p_ref.shape[0]           # batch elements per grid step (static)
    d_in = pool_ref.shape[0]

    feats = []
    for bb in range(bb_n):          # static unroll over the batch block
        # ---- conv1 (k=10, stride 2): host-built im2col patches -> one matmul ----
        x1 = p_ref[bb]                                              # (L1, 10*d_in) bf16
        y = _gelu(jnp.dot(x1, w1_ref[...],
                          preferred_element_type=jnp.float32) + b1_ref[...])

        # ---- conv stack, each layer = one im2col matmul ----
        y = _gelu(_conv_im2col(y, w2_ref, b2_ref, 5))               # (L2, d_model)
        y = _gelu(_conv_im2col(y, w3_ref, b3_ref, 3))               # (L3, 2*d_model)
        y = _gelu(_conv_im2col(y, w4_ref, b4_ref, 3))               # (L4, d_model)
        y = _conv_im2col(y, w5_ref, b5_ref, 3)                      # (Lf5, d_model)

        # ---- stride-2 selection of conv5 + AdaptiveAvgPool1d(d_in): one matmul ----
        pooled = jnp.dot(pool_ref[...], y.astype(jnp.bfloat16),
                         preferred_element_type=jnp.float32)        # (d_in, d_model)

        # flatten without reshape: lane-concat the d_in pooled rows -> (1, d_in*d_model)
        flat = jnp.concatenate([pooled[i:i + 1, :] for i in range(d_in)], axis=1)
        feats.append(flat)

    # ---- MLP head once per grid step with M = batch_block ----
    h = feats[0] if bb_n == 1 else jnp.concatenate(feats, axis=0)   # (BB, d_in*d_model)
    h = _gelu(jnp.dot(h.astype(jnp.bfloat16), l1w_ref[...],
                      preferred_element_type=jnp.float32) + l1b_ref[...])
    h = _gelu(jnp.dot(h.astype(jnp.bfloat16), l2w_ref[...],
                      preferred_element_type=jnp.float32) + l2b_ref[...])
    out = jnp.dot(h.astype(jnp.bfloat16), l3w_ref[...],
                  preferred_element_type=jnp.float32) + l3b_ref[...]
    out_ref[...] = out.astype(out_ref.dtype)                        # (BB, d_out) slab


def cnn_forward(x, params, d_model, d_out, batch_block=None):
    B, L0, d_in = x.shape
    c1 = 4 * d_in
    bf = jnp.bfloat16

    # 'valid' conv output lengths
    l1 = (L0 - 10) // 2 + 1          # conv1: k=10, stride 2
    l2 = l1 - 4                      # conv2: k=5
    l3 = l2 - 2                      # conv3: k=3
    l4 = l3 - 2                      # conv4: k=3
    lf5 = l4 - 2                     # conv5 at stride 1 (stride 2 folded into pool matrix)
    l5 = (l4 - 3) // 2 + 1           # true conv5 (stride 2) output length
    assert l5 >= 1 and lf5 >= 1

    # batch blocking: keep >= 2 grid steps (v7x has 2 TensorCores), bound the unroll
    if batch_block is None:
        batch_block = max(1, min(8, B // 2)) if B > 1 else 1
    bb = int(batch_block)
    g = -(-B // bb)
    bp = g * bb

    # host-side im2col for conv1 (k=10, stride 2): (B, L1, 10*d_in), bf16 MXU operand
    cols = [x[:, k:k + 2 * l1:2, :] for k in range(10)]
    patches = jnp.concatenate(cols, axis=-1).astype(bf)
    if bp != B:
        patches = jnp.concatenate(
            [patches, jnp.zeros((bp - B, l1, 10 * d_in), patches.dtype)], axis=0)
    patches = patches.reshape(g, bb, l1, 10 * d_in)

    # fused (stride-2 row selection of conv5) + AdaptiveAvgPool1d(d_in): (d_in, Lf5)
    pool = np.zeros((d_in, lf5), np.float32)
    for i in range(d_in):
        s = (i * l5) // d_in
        e = ((i + 1) * l5 + d_in - 1) // d_in
        pool[i, 2 * s:2 * e:2] = 1.0 / (e - s)
    pool = jnp.asarray(pool).astype(bf)

    # host-flattened conv weights (K, Cin, Cout) -> (K*Cin, Cout), bf16
    w1f = params["w1"].reshape(10 * d_in, c1).astype(bf)
    w2f = params["w2"].reshape(5 * c1, d_model).astype(bf)
    w3f = params["w3"].reshape(3 * d_model, 2 * d_model).astype(bf)
    w4f = params["w4"].reshape(3 * 2 * d_model, d_model).astype(bf)
    w5f = params["w5"].reshape(3 * d_model, d_model).astype(bf)

    # Linear#1 weight permuted so the kernel's position-major flatten of the
    # (d_in, d_model) pooled map matches torch's channel-major flatten
    l1w = params["l1w"].reshape(d_model, d_in, 2 * d_model).transpose(1, 0, 2)
    l1w = l1w.reshape(d_in * d_model, 2 * d_model).astype(bf)
    l2w = params["l2w"].astype(bf)
    l3w = params["l3w"].astype(bf)

    def full(a):
        return pl.BlockSpec(a.shape, lambda gi: (0,) * a.ndim)

    # advisory cost estimate for XLA scheduling around this custom call
    mm = (l1 * (10 * d_in) * c1
          + l2 * (5 * c1) * d_model
          + l3 * (3 * d_model) * (2 * d_model)
          + l4 * (3 * 2 * d_model) * d_model
          + lf5 * (3 * d_model) * d_model
          + d_in * lf5 * d_model
          + (d_in * d_model) * (2 * d_model)
          + (2 * d_model) * d_model
          + d_model * d_out)
    transc = bp * (l1 * c1 + l2 * d_model + l3 * 2 * d_model + l4 * d_model
                   + 2 * d_model + d_model)
    weight_bytes = sum(int(a.size) * a.dtype.itemsize for a in
                       [w1f, w2f, w3f, w4f, w5f, pool, l1w, l2w, l3w,
                        params["b1"], params["b2"], params["b3"], params["b4"],
                        params["b5"], params["l1b"], params["l2b"], params["l3b"]])
    bytes_acc = int(patches.size) * 2 + weight_bytes + bp * d_out * 4

    out = pl.pallas_call(
        _cnn_kernel,
        out_shape=jax.ShapeDtypeStruct((g, bb, d_out), jnp.float32),
        grid=(g,),
        in_specs=[
            pl.BlockSpec((None, bb, l1, 10 * d_in), lambda gi: (gi, 0, 0, 0)),
            full(w1f), full(params["b1"]),
            full(w2f), full(params["b2"]),
            full(w3f), full(params["b3"]),
            full(w4f), full(params["b4"]),
            full(w5f), full(params["b5"]),
            full(pool),
            full(l1w), full(params["l1b"]),
            full(l2w), full(params["l2b"]),
            full(l3w), full(params["l3b"]),
        ],
        out_specs=pl.BlockSpec((None, bb, d_out), lambda gi: (gi, 0, 0)),
        compiler_params=pltpu.CompilerParams(dimension_semantics=("parallel",)),
        cost_estimate=pl.CostEstimate(flops=2 * mm * bp, transcendentals=transc,
                                      bytes_accessed=bytes_acc),
    )(patches,
      w1f, params["b1"], w2f, params["b2"], w3f, params["b3"],
      w4f, params["b4"], w5f, params["b5"], pool,
      l1w, params["l1b"], l2w, params["l2b"], l3w, params["l3b"])

    return out.reshape(bp, d_out)[:B]


def init_params(key, d_in, d_model, d_out):
    c1 = 4 * d_in
    ks = jax.random.split(key, 16)

    def u(k, shape, fan_in):
        bound = 1.0 / math.sqrt(fan_in)
        return jax.random.uniform(k, shape, jnp.float32, -bound, bound)

    return {
        # Conv1d weights stored as (K, Cin, Cout); biases as (1, Cout)
        "w1": u(ks[0], (10, d_in, c1), d_in * 10),      "b1": u(ks[1], (1, c1), d_in * 10),
        "w2": u(ks[2], (5, c1, d_model), c1 * 5),       "b2": u(ks[3], (1, d_model), c1 * 5),
        "w3": u(ks[4], (3, d_model, 2 * d_model), d_model * 3),
        "b3": u(ks[5], (1, 2 * d_model), d_model * 3),
        "w4": u(ks[6], (3, 2 * d_model, d_model), 2 * d_model * 3),
        "b4": u(ks[7], (1, d_model), 2 * d_model * 3),
        "w5": u(ks[8], (3, d_model, d_model), d_model * 3),
        "b5": u(ks[9], (1, d_model), d_model * 3),
        # Linear weights stored as (in, out); biases as (1, out)
        "l1w": u(ks[10], (d_in * d_model, 2 * d_model), d_in * d_model),
        "l1b": u(ks[11], (1, 2 * d_model), d_in * d_model),
        "l2w": u(ks[12], (2 * d_model, d_model), 2 * d_model),
        "l2b": u(ks[13], (1, d_model), 2 * d_model),
        "l3w": u(ks[14], (d_model, d_out), d_model),
        "l3b": u(ks[15], (1, d_out), d_model),
    }


def cnn_reference(x, params, d_model, d_out):
    """Pure-JAX (XLA, f32 HIGHEST) reference of the same forward pass."""
    B, L0, d_in = x.shape
    hp = jax.lax.Precision.HIGHEST
    h = jnp.transpose(x, (0, 2, 1))                      # (B, d_in, L0) channels-first

    def conv(h, w, b, stride):
        wt = jnp.transpose(w, (2, 1, 0))                 # (Cout, Cin, K)
        out = jax.lax.conv_general_dilated(
            h, wt, (stride,), "VALID",
            dimension_numbers=("NCH", "OIH", "NCH"), precision=hp)
        return out + b.reshape(1, -1, 1)

    h = _gelu(conv(h, params["w1"], params["b1"], 2))
    h = _gelu(conv(h, params["w2"], params["b2"], 1))
    h = _gelu(conv(h, params["w3"], params["b3"], 1))
    h = _gelu(conv(h, params["w4"], params["b4"], 1))
    h = conv(h, params["w5"], params["b5"], 2)           # (B, d_model, L5)
    L5 = h.shape[-1]
    cols = []
    for i in range(d_in):                                # AdaptiveAvgPool1d(d_in)
        s = (i * L5) // d_in
        e = ((i + 1) * L5 + d_in - 1) // d_in
        cols.append(jnp.mean(h[:, :, s:e], axis=-1))
    h = jnp.stack(cols, axis=-1).reshape(B, d_model * d_in)
    h = _gelu(jnp.dot(h, params["l1w"], precision=hp) + params["l1b"].reshape(-1))
    h = _gelu(jnp.dot(h, params["l2w"], precision=hp) + params["l2b"].reshape(-1))
    return jnp.dot(h, params["l3w"], precision=hp) + params["l3b"].reshape(-1)


if __name__ == "__main__":
    d_in, d_model, d_out = 4, 32, 8
    batch, seq_len = 4, 58            # seq_len chosen so the conv stack output length is 8
    # default batch_block -> 2, grid=(2,): exercises batch-blocking and keeps 2 grid steps

    key = jax.random.PRNGKey(0)
    pkey, xkey = jax.random.split(key)
    params = init_params(pkey, d_in, d_model, d_out)
    x = jax.random.normal(xkey, (batch, seq_len, d_in), jnp.float32)

    fwd = jax.jit(cnn_forward, static_argnames=("d_model", "d_out", "batch_block"))
    out = jax.block_until_ready(fwd(x, params, d_model=d_model, d_out=d_out))

    assert out.shape == (batch, d_out)
    assert bool(jnp.all(jnp.isfinite(out)))

    # Tolerance covers bf16 MXU operands (f32 accumulation) vs the f32 HIGHEST reference.
    ref = cnn_reference(x, params, d_model, d_out)
    assert bool(jnp.allclose(out, ref, rtol=2e-2, atol=2e-2)), \
        float(jnp.max(jnp.abs(out - ref)))

    print("KERNEL_OK")
</pallas_src>

<mosaic_0001>
module attributes {stable_mosaic.version = 11 : i64} {
  func.func @_cnn_kernel(%arg0: i32, %arg1: memref<1x2x25x40xbf16, #tpu.memory_space<vmem>>, %arg2: memref<40x16xbf16, #tpu.memory_space<vmem>>, %arg3: memref<1x16xf32, #tpu.memory_space<vmem>>, %arg4: memref<80x32xbf16, #tpu.memory_space<vmem>>, %arg5: memref<1x32xf32, #tpu.memory_space<vmem>>, %arg6: memref<96x64xbf16, #tpu.memory_space<vmem>>, %arg7: memref<1x64xf32, #tpu.memory_space<vmem>>, %arg8: memref<192x32xbf16, #tpu.memory_space<vmem>>, %arg9: memref<1x32xf32, #tpu.memory_space<vmem>>, %arg10: memref<96x32xbf16, #tpu.memory_space<vmem>>, %arg11: memref<1x32xf32, #tpu.memory_space<vmem>>, %arg12: memref<4x15xbf16, #tpu.memory_space<vmem>>, %arg13: memref<128x64xbf16, #tpu.memory_space<vmem>>, %arg14: memref<1x64xf32, #tpu.memory_space<vmem>>, %arg15: memref<64x32xbf16, #tpu.memory_space<vmem>>, %arg16: memref<1x32xf32, #tpu.memory_space<vmem>>, %arg17: memref<32x8xbf16, #tpu.memory_space<vmem>>, %arg18: memref<1x8xf32, #tpu.memory_space<vmem>>, %arg19: memref<1x2x8xf32, #tpu.memory_space<vmem>>) attributes {dimension_semantics = [#tpu.dimension_semantics<parallel>], iteration_bounds = array<i64: 2>, scalar_prefetch = 0 : i64, scratch_operands = 0 : i64, tpu.core_type = #tpu.core_type<tc>, window_params = [{transform_indices = @transform_0, window_bounds = array<i64: 1, 2, 25, 40>}, {pipeline_mode = #tpu.pipeline_mode<synchronous>, transform_indices = @transform_1, window_bounds = array<i64: 40, 16>}, {pipeline_mode = #tpu.pipeline_mode<synchronous>, transform_indices = @transform_2, window_bounds = array<i64: 1, 16>}, {pipeline_mode = #tpu.pipeline_mode<synchronous>, transform_indices = @transform_3, window_bounds = array<i64: 80, 32>}, {pipeline_mode = #tpu.pipeline_mode<synchronous>, transform_indices = @transform_4, window_bounds = array<i64: 1, 32>}, {pipeline_mode = #tpu.pipeline_mode<synchronous>, transform_indices = @transform_5, window_bounds = array<i64: 96, 64>}, {pipeline_mode = #tpu.pipeline_mode<synchronous>, transform_indices = @transform_6, window_bounds = array<i64: 1, 64>}, {pipeline_mode = #tpu.pipeline_mode<synchronous>, transform_indices = @transform_7, window_bounds = array<i64: 192, 32>}, {pipeline_mode = #tpu.pipeline_mode<synchronous>, transform_indices = @transform_8, window_bounds = array<i64: 1, 32>}, {pipeline_mode = #tpu.pipeline_mode<synchronous>, transform_indices = @transform_9, window_bounds = array<i64: 96, 32>}, {pipeline_mode = #tpu.pipeline_mode<synchronous>, transform_indices = @transform_10, window_bounds = array<i64: 1, 32>}, {pipeline_mode = #tpu.pipeline_mode<synchronous>, transform_indices = @transform_11, window_bounds = array<i64: 4, 15>}, {pipeline_mode = #tpu.pipeline_mode<synchronous>, transform_indices = @transform_12, window_bounds = array<i64: 128, 64>}, {pipeline_mode = #tpu.pipeline_mode<synchronous>, transform_indices = @transform_13, window_bounds = array<i64: 1, 64>}, {pipeline_mode = #tpu.pipeline_mode<synchronous>, transform_indices = @transform_14, window_bounds = array<i64: 64, 32>}, {pipeline_mode = #tpu.pipeline_mode<synchronous>, transform_indices = @transform_15, window_bounds = array<i64: 1, 32>}, {pipeline_mode = #tpu.pipeline_mode<synchronous>, transform_indices = @transform_16, window_bounds = array<i64: 32, 8>}, {pipeline_mode = #tpu.pipeline_mode<synchronous>, transform_indices = @transform_17, window_bounds = array<i64: 1, 8>}, {transform_indices = @transform_18, window_bounds = array<i64: 1, 2, 8>}]} {
    %c0 = arith.constant 0 : index
    %c0_0 = arith.constant 0 : index
    %c0_1 = arith.constant 0 : index
    %c0_2 = arith.constant 0 : index
    %0 = vector.load %arg1[%c0, %c0_0, %c0_1, %c0_2] : memref<1x2x25x40xbf16, #tpu.memory_space<vmem>>, vector<1x1x25x40xbf16>
    %1 = vector.shape_cast %0 : vector<1x1x25x40xbf16> to vector<25x40xbf16>
    %c0_3 = arith.constant 0 : index
    %c0_4 = arith.constant 0 : index
    %2 = vector.load %arg2[%c0_3, %c0_4] : memref<40x16xbf16, #tpu.memory_space<vmem>>, vector<40x16xbf16>
    %cst = arith.constant dense<0.000000e+00> : vector<25x16xf32>
    %3 = tpu.matmul %1, %2, %cst {dimension_numbers = #tpu.dot_dimension_numbers<[1], [0], [0], [1], [0, 0, 1, 1], [], []>} : vector<25x40xbf16>, vector<40x16xbf16>, vector<25x16xf32> -> vector<25x16xf32>
    %c0_5 = arith.constant 0 : index
    %c0_6 = arith.constant 0 : index
    %4 = vector.load %arg3[%c0_5, %c0_6] : memref<1x16xf32, #tpu.memory_space<vmem>>, vector<1x16xf32>
    %5 = vector.broadcast %4 : vector<1x16xf32> to vector<25x16xf32>
    %6 = arith.addf %3, %5 : vector<25x16xf32>
    %7 = arith.mulf %6, %6 : vector<25x16xf32>
    %8 = arith.mulf %6, %7 : vector<25x16xf32>
    %cst_7 = arith.constant 4.471500e-02 : f32
    %9 = vector.broadcast %cst_7 : f32 to vector<25x16xf32>
    %10 = arith.mulf %9, %8 : vector<25x16xf32>
    %11 = arith.addf %6, %10 : vector<25x16xf32>
    %cst_8 = arith.constant 0.797884583 : f32
    %12 = vector.broadcast %cst_8 : f32 to vector<25x16xf32>
    %13 = arith.mulf %12, %11 : vector<25x16xf32>
    %14 = math.tanh %13 : vector<25x16xf32>
    %cst_9 = arith.constant 1.000000e+00 : f32
    %15 = vector.broadcast %cst_9 : f32 to vector<25x16xf32>
    %16 = arith.addf %15, %14 : vector<25x16xf32>
    %cst_10 = arith.constant 5.000000e-01 : f32
    %17 = vector.broadcast %cst_10 : f32 to vector<25x16xf32>
    %18 = arith.mulf %17, %16 : vector<25x16xf32>
    %19 = arith.mulf %6, %18 : vector<25x16xf32>
    %20 = vector.extract_strided_slice %19 {offsets = [0, 0], sizes = [21, 16], strides = [1, 1]} : vector<25x16xf32> to vector<21x16xf32>
    %21 = vector.extract_strided_slice %19 {offsets = [1, 0], sizes = [21, 16], strides = [1, 1]} : vector<25x16xf32> to vector<21x16xf32>
    %22 = vector.extract_strided_slice %19 {offsets = [2, 0], sizes = [21, 16], strides = [1, 1]} : vector<25x16xf32> to vector<21x16xf32>
    %23 = vector.extract_strided_slice %19 {offsets = [3, 0], sizes = [21, 16], strides = [1, 1]} : vector<25x16xf32> to vector<21x16xf32>
    %24 = vector.extract_strided_slice %19 {offsets = [4, 0], sizes = [21, 16], strides = [1, 1]} : vector<25x16xf32> to vector<21x16xf32>
    %25 = tpu.concatenate %20, %21, %22, %23, %24 in 1 : vector<21x16xf32>, vector<21x16xf32>, vector<21x16xf32>, vector<21x16xf32>, vector<21x16xf32> -> vector<21x80xf32>
    %26 = arith.truncf %25 : vector<21x80xf32> to vector<21x80xbf16>
    %c0_11 = arith.constant 0 : index
    %c0_12 = arith.constant 0 : index
    %27 = vector.load %arg4[%c0_11, %c0_12] : memref<80x32xbf16, #tpu.memory_space<vmem>>, vector<80x32xbf16>
    %cst_13 = arith.constant dense<0.000000e+00> : vector<21x32xf32>
    %28 = tpu.matmul %26, %27, %cst_13 {dimension_numbers = #tpu.dot_dimension_numbers<[1], [0], [0], [1], [0, 0, 1, 1], [], []>} : vector<21x80xbf16>, vector<80x32xbf16>, vector<21x32xf32> -> vector<21x32xf32>
    %c0_14 = arith.constant 0 : index
    %c0_15 = arith.constant 0 : index
    %29 = vector.load %arg5[%c0_14, %c0_15] : memref<1x32xf32, #tpu.memory_space<vmem>>, vector<1x32xf32>
    %30 = vector.broadcast %29 : vector<1x32xf32> to vector<21x32xf32>
    %31 = arith.addf %28, %30 : vector<21x32xf32>
    %32 = arith.mulf %31, %31 : vector<21x32xf32>
    %33 = arith.mulf %31, %32 : vector<21x32xf32>
    %cst_16 = arith.constant 4.471500e-02 : f32
    %34 = vector.broadcast %cst_16 : f32 to vector<21x32xf32>
    %35 = arith.mulf %34, %33 : vector<21x32xf32>
    %36 = arith.addf %31, %35 : vector<21x32xf32>
    %cst_17 = arith.constant 0.797884583 : f32
    %37 = vector.broadcast %cst_17 : f32 to vector<21x32xf32>
    %38 = arith.mulf %37, %36 : vector<21x32xf32>
    %39 = math.tanh %38 : vector<21x32xf32>
    %cst_18 = arith.constant 1.000000e+00 : f32
    %40 = vector.broadcast %cst_18 : f32 to vector<21x32xf32>
    %41 = arith.addf %40, %39 : vector<21x32xf32>
    %cst_19 = arith.constant 5.000000e-01 : f32
    %42 = vector.broadcast %cst_19 : f32 to vector<21x32xf32>
    %43 = arith.mulf %42, %41 : vector<21x32xf32>
    %44 = arith.mulf %31, %43 : vector<21x32xf32>
    %45 = vector.extract_strided_slice %44 {offsets = [0, 0], sizes = [19, 32], strides = [1, 1]} : vector<21x32xf32> to vector<19x32xf32>
    %46 = vector.extract_strided_slice %44 {offsets = [1, 0], sizes = [19, 32], strides = [1, 1]} : vector<21x32xf32> to vector<19x32xf32>
    %47 = vector.extract_strided_slice %44 {offsets = [2, 0], sizes = [19, 32], strides = [1, 1]} : vector<21x32xf32> to vector<19x32xf32>
    %48 = tpu.concatenate %45, %46, %47 in 1 : vector<19x32xf32>, vector<19x32xf32>, vector<19x32xf32> -> vector<19x96xf32>
    %49 = arith.truncf %48 : vector<19x96xf32> to vector<19x96xbf16>
    %c0_20 = arith.constant 0 : index
    %c0_21 = arith.constant 0 : index
    %50 = vector.load %arg6[%c0_20, %c0_21] : memref<96x64xbf16, #tpu.memory_space<vmem>>, vector<96x64xbf16>
    %cst_22 = arith.constant dense<0.000000e+00> : vector<19x64xf32>
    %51 = tpu.matmul %49, %50, %cst_22 {dimension_numbers = #tpu.dot_dimension_numbers<[1], [0], [0], [1], [0, 0, 1, 1], [], []>} : vector<19x96xbf16>, vector<96x64xbf16>, vector<19x64xf32> -> vector<19x64xf32>
    %c0_23 = arith.constant 0 : index
    %c0_24 = arith.constant 0 : index
    %52 = vector.load %arg7[%c0_23, %c0_24] : memref<1x64xf32, #tpu.memory_space<vmem>>, vector<1x64xf32>
    %53 = vector.broadcast %52 : vector<1x64xf32> to vector<19x64xf32>
    %54 = arith.addf %51, %53 : vector<19x64xf32>
    %55 = arith.mulf %54, %54 : vector<19x64xf32>
    %56 = arith.mulf %54, %55 : vector<19x64xf32>
    %cst_25 = arith.constant 4.471500e-02 : f32
    %57 = vector.broadcast %cst_25 : f32 to vector<19x64xf32>
    %58 = arith.mulf %57, %56 : vector<19x64xf32>
    %59 = arith.addf %54, %58 : vector<19x64xf32>
    %cst_26 = arith.constant 0.797884583 : f32
    %60 = vector.broadcast %cst_26 : f32 to vector<19x64xf32>
    %61 = arith.mulf %60, %59 : vector<19x64xf32>
    %62 = math.tanh %61 : vector<19x64xf32>
    %cst_27 = arith.constant 1.000000e+00 : f32
    %63 = vector.broadcast %cst_27 : f32 to vector<19x64xf32>
    %64 = arith.addf %63, %62 : vector<19x64xf32>
    %cst_28 = arith.constant 5.000000e-01 : f32
    %65 = vector.broadcast %cst_28 : f32 to vector<19x64xf32>
    %66 = arith.mulf %65, %64 : vector<19x64xf32>
    %67 = arith.mulf %54, %66 : vector<19x64xf32>
    %68 = vector.extract_strided_slice %67 {offsets = [0, 0], sizes = [17, 64], strides = [1, 1]} : vector<19x64xf32> to vector<17x64xf32>
    %69 = vector.extract_strided_slice %67 {offsets = [1, 0], sizes = [17, 64], strides = [1, 1]} : vector<19x64xf32> to vector<17x64xf32>
    %70 = vector.extract_strided_slice %67 {offsets = [2, 0], sizes = [17, 64], strides = [1, 1]} : vector<19x64xf32> to vector<17x64xf32>
    %71 = tpu.concatenate %68, %69, %70 in 1 : vector<17x64xf32>, vector<17x64xf32>, vector<17x64xf32> -> vector<17x192xf32>
    %72 = arith.truncf %71 : vector<17x192xf32> to vector<17x192xbf16>
    %c0_29 = arith.constant 0 : index
    %c0_30 = arith.constant 0 : index
    %73 = vector.load %arg8[%c0_29, %c0_30] : memref<192x32xbf16, #tpu.memory_space<vmem>>, vector<192x32xbf16>
    %cst_31 = arith.constant dense<0.000000e+00> : vector<17x32xf32>
    %74 = tpu.matmul %72, %73, %cst_31 {dimension_numbers = #tpu.dot_dimension_numbers<[1], [0], [0], [1], [0, 0, 1, 1], [], []>} : vector<17x192xbf16>, vector<192x32xbf16>, vector<17x32xf32> -> vector<17x32xf32>
    %c0_32 = arith.constant 0 : index
    %c0_33 = arith.constant 0 : index
    %75 = vector.load %arg9[%c0_32, %c0_33] : memref<1x32xf32, #tpu.memory_space<vmem>>, vector<1x32xf32>
    %76 = vector.broadcast %75 : vector<1x32xf32> to vector<17x32xf32>
    %77 = arith.addf %74, %76 : vector<17x32xf32>
    %78 = arith.mulf %77, %77 : vector<17x32xf32>
    %79 = arith.mulf %77, %78 : vector<17x32xf32>
    %cst_34 = arith.constant 4.471500e-02 : f32
    %80 = vector.broadcast %cst_34 : f32 to vector<17x32xf32>
    %81 = arith.mulf %80, %79 : vector<17x32xf32>
    %82 = arith.addf %77, %81 : vector<17x32xf32>
    %cst_35 = arith.constant 0.797884583 : f32
    %83 = vector.broadcast %cst_35 : f32 to vector<17x32xf32>
    %84 = arith.mulf %83, %82 : vector<17x32xf32>
    %85 = math.tanh %84 : vector<17x32xf32>
    %cst_36 = arith.constant 1.000000e+00 : f32
    %86 = vector.broadcast %cst_36 : f32 to vector<17x32xf32>
    %87 = arith.addf %86, %85 : vector<17x32xf32>
    %cst_37 = arith.constant 5.000000e-01 : f32
    %88 = vector.broadcast %cst_37 : f32 to vector<17x32xf32>
    %89 = arith.mulf %88, %87 : vector<17x32xf32>
    %90 = arith.mulf %77, %89 : vector<17x32xf32>
    %91 = vector.extract_strided_slice %90 {offsets = [0, 0], sizes = [15, 32], strides = [1, 1]} : vector<17x32xf32> to vector<15x32xf32>
    %92 = vector.extract_strided_slice %90 {offsets = [1, 0], sizes = [15, 32], strides = [1, 1]} : vector<17x32xf32> to vector<15x32xf32>
    %93 = vector.extract_strided_slice %90 {offsets = [2, 0], sizes = [15, 32], strides = [1, 1]} : vector<17x32xf32> to vector<15x32xf32>
    %94 = tpu.concatenate %91, %92, %93 in 1 : vector<15x32xf32>, vector<15x32xf32>, vector<15x32xf32> -> vector<15x96xf32>
    %95 = arith.truncf %94 : vector<15x96xf32> to vector<15x96xbf16>
    %c0_38 = arith.constant 0 : index
    %c0_39 = arith.constant 0 : index
    %96 = vector.load %arg10[%c0_38, %c0_39] : memref<96x32xbf16, #tpu.memory_space<vmem>>, vector<96x32xbf16>
    %cst_40 = arith.constant dense<0.000000e+00> : vector<15x32xf32>
    %97 = tpu.matmul %95, %96, %cst_40 {dimension_numbers = #tpu.dot_dimension_numbers<[1], [0], [0], [1], [0, 0, 1, 1], [], []>} : vector<15x96xbf16>, vector<96x32xbf16>, vector<15x32xf32> -> vector<15x32xf32>
    %c0_41 = arith.constant 0 : index
    %c0_42 = arith.constant 0 : index
    %98 = vector.load %arg11[%c0_41, %c0_42] : memref<1x32xf32, #tpu.memory_space<vmem>>, vector<1x32xf32>
    %99 = vector.broadcast %98 : vector<1x32xf32> to vector<15x32xf32>
    %100 = arith.addf %97, %99 : vector<15x32xf32>
    %c0_43 = arith.constant 0 : index
    %c0_44 = arith.constant 0 : index
    %101 = vector.load %arg12[%c0_43, %c0_44] : memref<4x15xbf16, #tpu.memory_space<vmem>>, vector<4x15xbf16>
    %102 = arith.truncf %100 : vector<15x32xf32> to vector<15x32xbf16>
    %cst_45 = arith.constant dense<0.000000e+00> : vector<4x32xf32>
    %103 = tpu.matmul %101, %102, %cst_45 {dimension_numbers = #tpu.dot_dimension_numbers<[1], [0], [0], [1], [0, 0, 1, 1], [], []>} : vector<4x15xbf16>, vector<15x32xbf16>, vector<4x32xf32> -> vector<4x32xf32>
    %104 = vector.extract_strided_slice %103 {offsets = [0, 0], sizes = [1, 32], strides = [1, 1]} : vector<4x32xf32> to vector<1x32xf32>
    %105 = vector.extract_strided_slice %103 {offsets = [1, 0], sizes = [1, 32], strides = [1, 1]} : vector<4x32xf32> to vector<1x32xf32>
    %106 = vector.extract_strided_slice %103 {offsets = [2, 0], sizes = [1, 32], strides = [1, 1]} : vector<4x32xf32> to vector<1x32xf32>
    %107 = vector.extract_strided_slice %103 {offsets = [3, 0], sizes = [1, 32], strides = [1, 1]} : vector<4x32xf32> to vector<1x32xf32>
    %108 = tpu.concatenate %104, %105, %106, %107 in 1 : vector<1x32xf32>, vector<1x32xf32>, vector<1x32xf32>, vector<1x32xf32> -> vector<1x128xf32>
    %c0_46 = arith.constant 0 : index
    %c1 = arith.constant 1 : index
    %c0_47 = arith.constant 0 : index
    %c0_48 = arith.constant 0 : index
    %109 = vector.load %arg1[%c0_46, %c1, %c0_47, %c0_48] : memref<1x2x25x40xbf16, #tpu.memory_space<vmem>>, vector<1x1x25x40xbf16>
    %110 = vector.shape_cast %109 : vector<1x1x25x40xbf16> to vector<25x40xbf16>
    %c0_49 = arith.constant 0 : index
    %c0_50 = arith.constant 0 : index
    %111 = vector.load %arg2[%c0_49, %c0_50] : memref<40x16xbf16, #tpu.memory_space<vmem>>, vector<40x16xbf16>
    %cst_51 = arith.constant dense<0.000000e+00> : vector<25x16xf32>
    %112 = tpu.matmul %110, %111, %cst_51 {dimension_numbers = #tpu.dot_dimension_numbers<[1], [0], [0], [1], [0, 0, 1, 1], [], []>} : vector<25x40xbf16>, vector<40x16xbf16>, vector<25x16xf32> -> vector<25x16xf32>
    %c0_52 = arith.constant 0 : index
    %c0_53 = arith.constant 0 : index
    %113 = vector.load %arg3[%c0_52, %c0_53] : memref<1x16xf32, #tpu.memory_space<vmem>>, vector<1x16xf32>
    %114 = vector.broadcast %113 : vector<1x16xf32> to vector<25x16xf32>
    %115 = arith.addf %112, %114 : vector<25x16xf32>
    %116 = arith.mulf %115, %115 : vector<25x16xf32>
    %117 = arith.mulf %115, %116 : vector<25x16xf32>
    %cst_54 = arith.constant 4.471500e-02 : f32
    %118 = vector.broadcast %cst_54 : f32 to vector<25x16xf32>
    %119 = arith.mulf %118, %117 : vector<25x16xf32>
    %120 = arith.addf %115, %119 : vector<25x16xf32>
    %cst_55 = arith.constant 0.797884583 : f32
    %121 = vector.broadcast %cst_55 : f32 to vector<25x16xf32>
    %122 = arith.mulf %121, %120 : vector<25x16xf32>
    %123 = math.tanh %122 : vector<25x16xf32>
    %cst_56 = arith.constant 1.000000e+00 : f32
    %124 = vector.broadcast %cst_56 : f32 to vector<25x16xf32>
    %125 = arith.addf %124, %123 : vector<25x16xf32>
    %cst_57 = arith.constant 5.000000e-01 : f32
    %126 = vector.broadcast %cst_57 : f32 to vector<25x16xf32>
    %127 = arith.mulf %126, %125 : vector<25x16xf32>
    %128 = arith.mulf %115, %127 : vector<25x16xf32>
    %129 = vector.extract_strided_slice %128 {offsets = [0, 0], sizes = [21, 16], strides = [1, 1]} : vector<25x16xf32> to vector<21x16xf32>
    %130 = vector.extract_strided_slice %128 {offsets = [1, 0], sizes = [21, 16], strides = [1, 1]} : vector<25x16xf32> to vector<21x16xf32>
    %131 = vector.extract_strided_slice %128 {offsets = [2, 0], sizes = [21, 16], strides = [1, 1]} : vector<25x16xf32> to vector<21x16xf32>
    %132 = vector.extract_strided_slice %128 {offsets = [3, 0], sizes = [21, 16], strides = [1, 1]} : vector<25x16xf32> to vector<21x16xf32>
    %133 = vector.extract_strided_slice %128 {offsets = [4, 0], sizes = [21, 16], strides = [1, 1]} : vector<25x16xf32> to vector<21x16xf32>
    %134 = tpu.concatenate %129, %130, %131, %132, %133 in 1 : vector<21x16xf32>, vector<21x16xf32>, vector<21x16xf32>, vector<21x16xf32>, vector<21x16xf32> -> vector<21x80xf32>
    %135 = arith.truncf %134 : vector<21x80xf32> to vector<21x80xbf16>
    %c0_58 = arith.constant 0 : index
    %c0_59 = arith.constant 0 : index
    %136 = vector.load %arg4[%c0_58, %c0_59] : memref<80x32xbf16, #tpu.memory_space<vmem>>, vector<80x32xbf16>
    %cst_60 = arith.constant dense<0.000000e+00> : vector<21x32xf32>
    %137 = tpu.matmul %135, %136, %cst_60 {dimension_numbers = #tpu.dot_dimension_numbers<[1], [0], [0], [1], [0, 0, 1, 1], [], []>} : vector<21x80xbf16>, vector<80x32xbf16>, vector<21x32xf32> -> vector<21x32xf32>
    %c0_61 = arith.constant 0 : index
    %c0_62 = arith.constant 0 : index
    %138 = vector.load %arg5[%c0_61, %c0_62] : memref<1x32xf32, #tpu.memory_space<vmem>>, vector<1x32xf32>
    %139 = vector.broadcast %138 : vector<1x32xf32> to vector<21x32xf32>
    %140 = arith.addf %137, %139 : vector<21x32xf32>
    %141 = arith.mulf %140, %140 : vector<21x32xf32>
    %142 = arith.mulf %140, %141 : vector<21x32xf32>
    %cst_63 = arith.constant 4.471500e-02 : f32
    %143 = vector.broadcast %cst_63 : f32 to vector<21x32xf32>
    %144 = arith.mulf %143, %142 : vector<21x32xf32>
    %145 = arith.addf %140, %144 : vector<21x32xf32>
    %cst_64 = arith.constant 0.797884583 : f32
    %146 = vector.broadcast %cst_64 : f32 to vector<21x32xf32>
    %147 = arith.mulf %146, %145 : vector<21x32xf32>
    %148 = math.tanh %147 : vector<21x32xf32>
    %cst_65 = arith.constant 1.000000e+00 : f32
    %149 = vector.broadcast %cst_65 : f32 to vector<21x32xf32>
    %150 = arith.addf %149, %148 : vector<21x32xf32>
    %cst_66 = arith.constant 5.000000e-01 : f32
    %151 = vector.broadcast %cst_66 : f32 to vector<21x32xf32>
    %152 = arith.mulf %151, %150 : vector<21x32xf32>
    %153 = arith.mulf %140, %152 : vector<21x32xf32>
    %154 = vector.extract_strided_slice %153 {offsets = [0, 0], sizes = [19, 32], strides = [1, 1]} : vector<21x32xf32> to vector<19x32xf32>
    %155 = vector.extract_strided_slice %153 {offsets = [1, 0], sizes = [19, 32], strides = [1, 1]} : vector<21x32xf32> to vector<19x32xf32>
    %156 = vector.extract_strided_slice %153 {offsets = [2, 0], sizes = [19, 32], strides = [1, 1]} : vector<21x32xf32> to vector<19x32xf32>
    %157 = tpu.concatenate %154, %155, %156 in 1 : vector<19x32xf32>, vector<19x32xf32>, vector<19x32xf32> -> vector<19x96xf32>
    %158 = arith.truncf %157 : vector<19x96xf32> to vector<19x96xbf16>
    %c0_67 = arith.constant 0 : index
    %c0_68 = arith.constant 0 : index
    %159 = vector.load %arg6[%c0_67, %c0_68] : memref<96x64xbf16, #tpu.memory_space<vmem>>, vector<96x64xbf16>
    %cst_69 = arith.constant dense<0.000000e+00> : vector<19x64xf32>
    %160 = tpu.matmul %158, %159, %cst_69 {dimension_numbers = #tpu.dot_dimension_numbers<[1], [0], [0], [1], [0, 0, 1, 1], [], []>} : vector<19x96xbf16>, vector<96x64xbf16>, vector<19x64xf32> -> vector<19x64xf32>
    %c0_70 = arith.constant 0 : index
    %c0_71 = arith.constant 0 : index
    %161 = vector.load %arg7[%c0_70, %c0_71] : memref<1x64xf32, #tpu.memory_space<vmem>>, vector<1x64xf32>
    %162 = vector.broadcast %161 : vector<1x64xf32> to vector<19x64xf32>
    %163 = arith.addf %160, %162 : vector<19x64xf32>
    %164 = arith.mulf %163, %163 : vector<19x64xf32>
    %165 = arith.mulf %163, %164 : vector<19x64xf32>
    %cst_72 = arith.constant 4.471500e-02 : f32
    %166 = vector.broadcast %cst_72 : f32 to vector<19x64xf32>
    %167 = arith.mulf %166, %165 : vector<19x64xf32>
    %168 = arith.addf %163, %167 : vector<19x64xf32>
    %cst_73 = arith.constant 0.797884583 : f32
    %169 = vector.broadcast %cst_73 : f32 to vector<19x64xf32>
    %170 = arith.mulf %169, %168 : vector<19x64xf32>
    %171 = math.tanh %170 : vector<19x64xf32>
    %cst_74 = arith.constant 1.000000e+00 : f32
    %172 = vector.broadcast %cst_74 : f32 to vector<19x64xf32>
    %173 = arith.addf %172, %171 : vector<19x64xf32>
    %cst_75 = arith.constant 5.000000e-01 : f32
    %174 = vector.broadcast %cst_75 : f32 to vector<19x64xf32>
    %175 = arith.mulf %174, %173 : vector<19x64xf32>
    %176 = arith.mulf %163, %175 : vector<19x64xf32>
    %177 = vector.extract_strided_slice %176 {offsets = [0, 0], sizes = [17, 64], strides = [1, 1]} : vector<19x64xf32> to vector<17x64xf32>
    %178 = vector.extract_strided_slice %176 {offsets = [1, 0], sizes = [17, 64], strides = [1, 1]} : vector<19x64xf32> to vector<17x64xf32>
    %179 = vector.extract_strided_slice %176 {offsets = [2, 0], sizes = [17, 64], strides = [1, 1]} : vector<19x64xf32> to vector<17x64xf32>
    %180 = tpu.concatenate %177, %178, %179 in 1 : vector<17x64xf32>, vector<17x64xf32>, vector<17x64xf32> -> vector<17x192xf32>
    %181 = arith.truncf %180 : vector<17x192xf32> to vector<17x192xbf16>
    %c0_76 = arith.constant 0 : index
    %c0_77 = arith.constant 0 : index
    %182 = vector.load %arg8[%c0_76, %c0_77] : memref<192x32xbf16, #tpu.memory_space<vmem>>, vector<192x32xbf16>
    %cst_78 = arith.constant dense<0.000000e+00> : vector<17x32xf32>
    %183 = tpu.matmul %181, %182, %cst_78 {dimension_numbers = #tpu.dot_dimension_numbers<[1], [0], [0], [1], [0, 0, 1, 1], [], []>} : vector<17x192xbf16>, vector<192x32xbf16>, vector<17x32xf32> -> vector<17x32xf32>
    %c0_79 = arith.constant 0 : index
    %c0_80 = arith.constant 0 : index
    %184 = vector.load %arg9[%c0_79, %c0_80] : memref<1x32xf32, #tpu.memory_space<vmem>>, vector<1x32xf32>
    %185 = vector.broadcast %184 : vector<1x32xf32> to vector<17x32xf32>
    %186 = arith.addf %183, %185 : vector<17x32xf32>
    %187 = arith.mulf %186, %186 : vector<17x32xf32>
    %188 = arith.mulf %186, %187 : vector<17x32xf32>
    %cst_81 = arith.constant 4.471500e-02 : f32
    %189 = vector.broadcast %cst_81 : f32 to vector<17x32xf32>
    %190 = arith.mulf %189, %188 : vector<17x32xf32>
    %191 = arith.addf %186, %190 : vector<17x32xf32>
    %cst_82 = arith.constant 0.797884583 : f32
    %192 = vector.broadcast %cst_82 : f32 to vector<17x32xf32>
    %193 = arith.mulf %192, %191 : vector<17x32xf32>
    %194 = math.tanh %193 : vector<17x32xf32>
    %cst_83 = arith.constant 1.000000e+00 : f32
    %195 = vector.broadcast %cst_83 : f32 to vector<17x32xf32>
    %196 = arith.addf %195, %194 : vector<17x32xf32>
    %cst_84 = arith.constant 5.000000e-01 : f32
    %197 = vector.broadcast %cst_84 : f32 to vector<17x32xf32>
    %198 = arith.mulf %197, %196 : vector<17x32xf32>
    %199 = arith.mulf %186, %198 : vector<17x32xf32>
    %200 = vector.extract_strided_slice %199 {offsets = [0, 0], sizes = [15, 32], strides = [1, 1]} : vector<17x32xf32> to vector<15x32xf32>
    %201 = vector.extract_strided_slice %199 {offsets = [1, 0], sizes = [15, 32], strides = [1, 1]} : vector<17x32xf32> to vector<15x32xf32>
    %202 = vector.extract_strided_slice %199 {offsets = [2, 0], sizes = [15, 32], strides = [1, 1]} : vector<17x32xf32> to vector<15x32xf32>
    %203 = tpu.concatenate %200, %201, %202 in 1 : vector<15x32xf32>, vector<15x32xf32>, vector<15x32xf32> -> vector<15x96xf32>
    %204 = arith.truncf %203 : vector<15x96xf32> to vector<15x96xbf16>
    %c0_85 = arith.constant 0 : index
    %c0_86 = arith.constant 0 : index
    %205 = vector.load %arg10[%c0_85, %c0_86] : memref<96x32xbf16, #tpu.memory_space<vmem>>, vector<96x32xbf16>
    %cst_87 = arith.constant dense<0.000000e+00> : vector<15x32xf32>
    %206 = tpu.matmul %204, %205, %cst_87 {dimension_numbers = #tpu.dot_dimension_numbers<[1], [0], [0], [1], [0, 0, 1, 1], [], []>} : vector<15x96xbf16>, vector<96x32xbf16>, vector<15x32xf32> -> vector<15x32xf32>
    %c0_88 = arith.constant 0 : index
    %c0_89 = arith.constant 0 : index
    %207 = vector.load %arg11[%c0_88, %c0_89] : memref<1x32xf32, #tpu.memory_space<vmem>>, vector<1x32xf32>
    %208 = vector.broadcast %207 : vector<1x32xf32> to vector<15x32xf32>
    %209 = arith.addf %206, %208 : vector<15x32xf32>
    %c0_90 = arith.constant 0 : index
    %c0_91 = arith.constant 0 : index
    %210 = vector.load %arg12[%c0_90, %c0_91] : memref<4x15xbf16, #tpu.memory_space<vmem>>, vector<4x15xbf16>
    %211 = arith.truncf %209 : vector<15x32xf32> to vector<15x32xbf16>
    %cst_92 = arith.constant dense<0.000000e+00> : vector<4x32xf32>
    %212 = tpu.matmul %210, %211, %cst_92 {dimension_numbers = #tpu.dot_dimension_numbers<[1], [0], [0], [1], [0, 0, 1, 1], [], []>} : vector<4x15xbf16>, vector<15x32xbf16>, vector<4x32xf32> -> vector<4x32xf32>
    %213 = vector.extract_strided_slice %212 {offsets = [0, 0], sizes = [1, 32], strides = [1, 1]} : vector<4x32xf32> to vector<1x32xf32>
    %214 = vector.extract_strided_slice %212 {offsets = [1, 0], sizes = [1, 32], strides = [1, 1]} : vector<4x32xf32> to vector<1x32xf32>
    %215 = vector.extract_strided_slice %212 {offsets = [2, 0], sizes = [1, 32], strides = [1, 1]} : vector<4x32xf32> to vector<1x32xf32>
    %216 = vector.extract_strided_slice %212 {offsets = [3, 0], sizes = [1, 32], strides = [1, 1]} : vector<4x32xf32> to vector<1x32xf32>
    %217 = tpu.concatenate %213, %214, %215, %216 in 1 : vector<1x32xf32>, vector<1x32xf32>, vector<1x32xf32>, vector<1x32xf32> -> vector<1x128xf32>
    %218 = tpu.concatenate %108, %217 in 0 : vector<1x128xf32>, vector<1x128xf32> -> vector<2x128xf32>
    %219 = arith.truncf %218 : vector<2x128xf32> to vector<2x128xbf16>
    %c0_93 = arith.constant 0 : index
    %c0_94 = arith.constant 0 : index
    %220 = vector.load %arg13[%c0_93, %c0_94] : memref<128x64xbf16, #tpu.memory_space<vmem>>, vector<128x64xbf16>
    %cst_95 = arith.constant dense<0.000000e+00> : vector<2x64xf32>
    %221 = tpu.matmul %219, %220, %cst_95 {dimension_numbers = #tpu.dot_dimension_numbers<[1], [0], [0], [1], [0, 0, 1, 1], [], []>} : vector<2x128xbf16>, vector<128x64xbf16>, vector<2x64xf32> -> vector<2x64xf32>
    %c0_96 = arith.constant 0 : index
    %c0_97 = arith.constant 0 : index
    %222 = vector.load %arg14[%c0_96, %c0_97] : memref<1x64xf32, #tpu.memory_space<vmem>>, vector<1x64xf32>
    %223 = vector.broadcast %222 : vector<1x64xf32> to vector<2x64xf32>
    %224 = arith.addf %221, %223 : vector<2x64xf32>
    %225 = arith.mulf %224, %224 : vector<2x64xf32>
    %226 = arith.mulf %224, %225 : vector<2x64xf32>
    %cst_98 = arith.constant 4.471500e-02 : f32
    %227 = vector.broadcast %cst_98 : f32 to vector<2x64xf32>
    %228 = arith.mulf %227, %226 : vector<2x64xf32>
    %229 = arith.addf %224, %228 : vector<2x64xf32>
    %cst_99 = arith.constant 0.797884583 : f32
    %230 = vector.broadcast %cst_99 : f32 to vector<2x64xf32>
    %231 = arith.mulf %230, %229 : vector<2x64xf32>
    %232 = math.tanh %231 : vector<2x64xf32>
    %cst_100 = arith.constant 1.000000e+00 : f32
    %233 = vector.broadcast %cst_100 : f32 to vector<2x64xf32>
    %234 = arith.addf %233, %232 : vector<2x64xf32>
    %cst_101 = arith.constant 5.000000e-01 : f32
    %235 = vector.broadcast %cst_101 : f32 to vector<2x64xf32>
    %236 = arith.mulf %235, %234 : vector<2x64xf32>
    %237 = arith.mulf %224, %236 : vector<2x64xf32>
    %238 = arith.truncf %237 : vector<2x64xf32> to vector<2x64xbf16>
    %c0_102 = arith.constant 0 : index
    %c0_103 = arith.constant 0 : index
    %239 = vector.load %arg15[%c0_102, %c0_103] : memref<64x32xbf16, #tpu.memory_space<vmem>>, vector<64x32xbf16>
    %cst_104 = arith.constant dense<0.000000e+00> : vector<2x32xf32>
    %240 = tpu.matmul %238, %239, %cst_104 {dimension_numbers = #tpu.dot_dimension_numbers<[1], [0], [0], [1], [0, 0, 1, 1], [], []>} : vector<2x64xbf16>, vector<64x32xbf16>, vector<2x32xf32> -> vector<2x32xf32>
    %c0_105 = arith.constant 0 : index
    %c0_106 = arith.constant 0 : index
    %241 = vector.load %arg16[%c0_105, %c0_106] : memref<1x32xf32, #tpu.memory_space<vmem>>, vector<1x32xf32>
    %242 = vector.broadcast %241 : vector<1x32xf32> to vector<2x32xf32>
    %243 = arith.addf %240, %242 : vector<2x32xf32>
    %244 = arith.mulf %243, %243 : vector<2x32xf32>
    %245 = arith.mulf %243, %244 : vector<2x32xf32>
    %cst_107 = arith.constant 4.471500e-02 : f32
    %246 = vector.broadcast %cst_107 : f32 to vector<2x32xf32>
    %247 = arith.mulf %246, %245 : vector<2x32xf32>
    %248 = arith.addf %243, %247 : vector<2x32xf32>
    %cst_108 = arith.constant 0.797884583 : f32
    %249 = vector.broadcast %cst_108 : f32 to vector<2x32xf32>
    %250 = arith.mulf %249, %248 : vector<2x32xf32>
    %251 = math.tanh %250 : vector<2x32xf32>
    %cst_109 = arith.constant 1.000000e+00 : f32
    %252 = vector.broadcast %cst_109 : f32 to vector<2x32xf32>
    %253 = arith.addf %252, %251 : vector<2x32xf32>
    %cst_110 = arith.constant 5.000000e-01 : f32
    %254 = vector.broadcast %cst_110 : f32 to vector<2x32xf32>
    %255 = arith.mulf %254, %253 : vector<2x32xf32>
    %256 = arith.mulf %243, %255 : vector<2x32xf32>
    %257 = arith.truncf %256 : vector<2x32xf32> to vector<2x32xbf16>
    %c0_111 = arith.constant 0 : index
    %c0_112 = arith.constant 0 : index
    %258 = vector.load %arg17[%c0_111, %c0_112] : memref<32x8xbf16, #tpu.memory_space<vmem>>, vector<32x8xbf16>
    %cst_113 = arith.constant dense<0.000000e+00> : vector<2x8xf32>
    %259 = tpu.matmul %257, %258, %cst_113 {dimension_numbers = #tpu.dot_dimension_numbers<[1], [0], [0], [1], [0, 0, 1, 1], [], []>} : vector<2x32xbf16>, vector<32x8xbf16>, vector<2x8xf32> -> vector<2x8xf32>
    %c0_114 = arith.constant 0 : index
    %c0_115 = arith.constant 0 : index
    %260 = vector.load %arg18[%c0_114, %c0_115] : memref<1x8xf32, #tpu.memory_space<vmem>>, vector<1x8xf32>
    %261 = vector.broadcast %260 : vector<1x8xf32> to vector<2x8xf32>
    %262 = arith.addf %259, %261 : vector<2x8xf32>
    %c0_116 = arith.constant 0 : index
    %c0_117 = arith.constant 0 : index
    %c0_118 = arith.constant 0 : index
    %263 = vector.load %arg19[%c0_116, %c0_117, %c0_118] : memref<1x2x8xf32, #tpu.memory_space<vmem>>, vector<1x2x8xf32>
    %264 = vector.shape_cast %263 : vector<1x2x8xf32> to vector<2x8xf32>
    %265 = vector.shape_cast %262 : vector<2x8xf32> to vector<1x2x8xf32>
    tpu.vector_store %arg19[%c0_116, %c0_117, %c0_118], %265 {strides = array<i32>} : memref<1x2x8xf32, #tpu.memory_space<vmem>>, vector<1x2x8xf32>,
    return
  }
  func.func @transform_0(%arg0: i32) -> (i32, i32, i32, i32) {
    %c0_i32 = arith.constant 0 : i32
    %c0_i32_0 = arith.constant 0 : i32
    %c0_i32_1 = arith.constant 0 : i32
    %c0_i32_2 = arith.constant 0 : i32
    return %arg0, %c0_i32, %c0_i32_0, %c0_i32_1 : i32, i32, i32, i32
  }
  func.func @transform_1(%arg0: i32) -> (i32, i32) {
    %c0_i32 = arith.constant 0 : i32
    %c0_i32_0 = arith.constant 0 : i32
    %c0_i32_1 = arith.constant 0 : i32
    return %c0_i32, %c0_i32_0 : i32, i32
  }
  func.func @transform_2(%arg0: i32) -> (i32, i32) {
    %c0_i32 = arith.constant 0 : i32
    %c0_i32_0 = arith.constant 0 : i32
    %c0_i32_1 = arith.constant 0 : i32
    return %c0_i32, %c0_i32_0 : i32, i32
  }
  func.func @transform_3(%arg0: i32) -> (i32, i32) {
    %c0_i32 = arith.constant 0 : i32
    %c0_i32_0 = arith.constant 0 : i32
    %c0_i32_1 = arith.constant 0 : i32
    return %c0_i32, %c0_i32_0 : i32, i32
  }
  func.func @transform_4(%arg0: i32) -> (i32, i32) {
    %c0_i32 = arith.constant 0 : i32
    %c0_i32_0 = arith.constant 0 : i32
    %c0_i32_1 = arith.constant 0 : i32
    return %c0_i32, %c0_i32_0 : i32, i32
  }
  func.func @transform_5(%arg0: i32) -> (i32, i32) {
    %c0_i32 = arith.constant 0 : i32
    %c0_i32_0 = arith.constant 0 : i32
    %c0_i32_1 = arith.constant 0 : i32
    return %c0_i32, %c0_i32_0 : i32, i32
  }
  func.func @transform_6(%arg0: i32) -> (i32, i32) {
    %c0_i32 = arith.constant 0 : i32
    %c0_i32_0 = arith.constant 0 : i32
    %c0_i32_1 = arith.constant 0 : i32
    return %c0_i32, %c0_i32_0 : i32, i32
  }
  func.func @transform_7(%arg0: i32) -> (i32, i32) {
    %c0_i32 = arith.constant 0 : i32
    %c0_i32_0 = arith.constant 0 : i32
    %c0_i32_1 = arith.constant 0 : i32
    return %c0_i32, %c0_i32_0 : i32, i32
  }
  func.func @transform_8(%arg0: i32) -> (i32, i32) {
    %c0_i32 = arith.constant 0 : i32
    %c0_i32_0 = arith.constant 0 : i32
    %c0_i32_1 = arith.constant 0 : i32
    return %c0_i32, %c0_i32_0 : i32, i32
  }
  func.func @transform_9(%arg0: i32) -> (i32, i32) {
    %c0_i32 = arith.constant 0 : i32
    %c0_i32_0 = arith.constant 0 : i32
    %c0_i32_1 = arith.constant 0 : i32
    return %c0_i32, %c0_i32_0 : i32, i32
  }
  func.func @transform_10(%arg0: i32) -> (i32, i32) {
    %c0_i32 = arith.constant 0 : i32
    %c0_i32_0 = arith.constant 0 : i32
    %c0_i32_1 = arith.constant 0 : i32
    return %c0_i32, %c0_i32_0 : i32, i32
  }
  func.func @transform_11(%arg0: i32) -> (i32, i32) {
    %c0_i32 = arith.constant 0 : i32
    %c0_i32_0 = arith.constant 0 : i32
    %c0_i32_1 = arith.constant 0 : i32
    return %c0_i32, %c0_i32_0 : i32, i32
  }
  func.func @transform_12(%arg0: i32) -> (i32, i32) {
    %c0_i32 = arith.constant 0 : i32
    %c0_i32_0 = arith.constant 0 : i32
    %c0_i32_1 = arith.constant 0 : i32
    return %c0_i32, %c0_i32_0 : i32, i32
  }
  func.func @transform_13(%arg0: i32) -> (i32, i32) {
    %c0_i32 = arith.constant 0 : i32
    %c0_i32_0 = arith.constant 0 : i32
    %c0_i32_1 = arith.constant 0 : i32
    return %c0_i32, %c0_i32_0 : i32, i32
  }
  func.func @transform_14(%arg0: i32) -> (i32, i32) {
    %c0_i32 = arith.constant 0 : i32
    %c0_i32_0 = arith.constant 0 : i32
    %c0_i32_1 = arith.constant 0 : i32
    return %c0_i32, %c0_i32_0 : i32, i32
  }
  func.func @transform_15(%arg0: i32) -> (i32, i32) {
    %c0_i32 = arith.constant 0 : i32
    %c0_i32_0 = arith.constant 0 : i32
    %c0_i32_1 = arith.constant 0 : i32
    return %c0_i32, %c0_i32_0 : i32, i32
  }
  func.func @transform_16(%arg0: i32) -> (i32, i32) {
    %c0_i32 = arith.constant 0 : i32
    %c0_i32_0 = arith.constant 0 : i32
    %c0_i32_1 = arith.constant 0 : i32
    return %c0_i32, %c0_i32_0 : i32, i32
  }
  func.func @transform_17(%arg0: i32) -> (i32, i32) {
    %c0_i32 = arith.constant 0 : i32
    %c0_i32_0 = arith.constant 0 : i32
    %c0_i32_1 = arith.constant 0 : i32
    return %c0_i32, %c0_i32_0 : i32, i32
  }
  func.func @transform_18(%arg0: i32) -> (i32, i32, i32) {
    %c0_i32 = arith.constant 0 : i32
    %c0_i32_0 = arith.constant 0 : i32
    %c0_i32_1 = arith.constant 0 : i32
    return %arg0, %c0_i32, %c0_i32_0 : i32, i32, i32
  }
}

</mosaic_0001>

<llo_original>
// kernel: cnn_forward.1
$region0: #{cnn_forward.1}
  #allocation0 [shape = 'u32[]', space=smem, size = 0x4, offset = 0x4, fixed_abs, tag = 'smem constant byte address 0x4 - core index']
  #allocation1 [shape = 'u32[72,128]{1,0:T(1,128)}', space=vmem, size = 0x9000, scoped, tag = 'internal scratch']
  %s0 = inlined_call_operand.vmem [shape: bf16[2,2,25,40], index: 0, kind: input, shape index: {}]
  %s1 = inlined_call_operand.vmem [shape: bf16[40,16], index: 1, kind: input, shape index: {}]
  %s2 = inlined_call_operand.vmem [shape: f32[1,16], index: 2, kind: input, shape index: {}]
  %s3 = inlined_call_operand.vmem [shape: bf16[80,32], index: 3, kind: input, shape index: {}]
  %s4 = inlined_call_operand.vmem [shape: f32[1,32], index: 4, kind: input, shape index: {}]
  %s5 = inlined_call_operand.vmem [shape: bf16[96,64], index: 5, kind: input, shape index: {}]
  %s6 = inlined_call_operand.vmem [shape: f32[1,64], index: 6, kind: input, shape index: {}]
  %s7 = inlined_call_operand.vmem [shape: bf16[192,32], index: 7, kind: input, shape index: {}]
  %s8 = inlined_call_operand.vmem [shape: f32[1,32], index: 8, kind: input, shape index: {}]
  %s9 = inlined_call_operand.vmem [shape: bf16[96,32], index: 9, kind: input, shape index: {}]
  %s10 = inlined_call_operand.vmem [shape: f32[1,32], index: 10, kind: input, shape index: {}]
  %s11 = inlined_call_operand.vmem [shape: bf16[4,15], index: 11, kind: input, shape index: {}]
  %s12 = inlined_call_operand.vmem [shape: bf16[128,64], index: 12, kind: input, shape index: {}]
  %s13 = inlined_call_operand.vmem [shape: f32[1,64], index: 13, kind: input, shape index: {}]
  %s14 = inlined_call_operand.vmem [shape: bf16[64,32], index: 14, kind: input, shape index: {}]
  %s15 = inlined_call_operand.vmem [shape: f32[1,32], index: 15, kind: input, shape index: {}]
  %s16 = inlined_call_operand.vmem [shape: bf16[32,8], index: 16, kind: input, shape index: {}]
  %s17 = inlined_call_operand.vmem [shape: f32[1,8], index: 17, kind: input, shape index: {}]
  %s18 = inlined_call_operand.hbm [shape: f32[2,2,8], index: 18, kind: output, shape index: {}]
  %s19 = sld [smem:[#allocation0]]
  $region105: #{cnn_forward.1} parent=0
    _
  %s21 = ssub.s32 1, %s19
  %s22 = scalar_select 0, %s21, %s19
  $region1: #{cnn_forward.1} parent=0
    #allocation2 [shape = 'u8[2048]{0}', space=vmem, size = 0x800, scoped, tag = 'output window, operand 0']
    #allocation3 [shape = 's32[2]{0}', space=sflag, size = 0x8, scoped, tag = 'scoped memory for cnn_forward.1']
    %23 = vsyncpa [#allocation3], 0
    %s24 = scalar_lea.sflag [#allocation3], 1
    %25 = vsyncpa %s24, 0
    loop: start=0, step=1, limit=4
    $region2: #{cnn_forward.1} parent=1 // loop_pre_header
      _
    $region3: #{cnn_forward.1} parent=1 // loop_header
      %s27 = sphi 0, %s31
      %p28 = scmp.ge.s32.totalorder %s27, 4
      %s37 = sphi 0, %s39
      %s40 = sphi 0, %s37
      %s41 = sphi 0, %s40
      %s57 = sphi 0, %s41
      %s61 = sphi 0, %s61
      %s63 = sphi 0, %s61
      %s64 = sphi 0, %s63
      %s78 = sphi 0, %s64
      %s82 = sphi 0, %s82
      %s84 = sphi 0, %s82
      %s85 = sphi 0, %s84
      %s99 = sphi 0, %s85
      %s103 = sphi 0, %s103
      %s105 = sphi 0, %s103
      %s106 = sphi 0, %s105
      %s120 = sphi 0, %s106
      %s124 = sphi 0, %s124
      %s126 = sphi 0, %s124
      %s127 = sphi 0, %s126
      %s141 = sphi 0, %s127
      %s145 = sphi 0, %s145
      %s147 = sphi 0, %s145
      %s148 = sphi 0, %s147
      %s162 = sphi 0, %s148
      %s166 = sphi 0, %s166
      %s168 = sphi 0, %s166
      %s169 = sphi 0, %s168
      %s183 = sphi 0, %s169
      %s187 = sphi 0, %s187
      %s189 = sphi 0, %s187
      %s190 = sphi 0, %s189
      %s204 = sphi 0, %s190
      %s208 = sphi 0, %s208
      %s210 = sphi 0, %s208
      %s211 = sphi 0, %s210
      %s225 = sphi 0, %s211
      %s229 = sphi 0, %s229
      %s231 = sphi 0, %s229
      %s232 = sphi 0, %s231
      %s246 = sphi 0, %s232
      %s250 = sphi 0, %s250
      %s252 = sphi 0, %s250
      %s253 = sphi 0, %s252
      %s267 = sphi 0, %s253
      %s271 = sphi 0, %s271
      %s273 = sphi 0, %s271
      %s274 = sphi 0, %s273
      %s288 = sphi 0, %s274
      %s292 = sphi 0, %s292
      %s294 = sphi 0, %s292
      %s295 = sphi 0, %s294
      %s309 = sphi 0, %s295
      %s313 = sphi 0, %s313
      %s315 = sphi 0, %s313
      %s316 = sphi 0, %s315
      %s330 = sphi 0, %s316
      %s334 = sphi 0, %s334
      %s336 = sphi 0, %s334
      %s337 = sphi 0, %s336
      %s351 = sphi 0, %s337
      %s355 = sphi 0, %s355
      %s357 = sphi 0, %s355
      %s358 = sphi 0, %s357
      %s372 = sphi 0, %s358
      %s376 = sphi 0, %s376
      %s378 = sphi 0, %s376
      %s379 = sphi 0, %s378
      %s393 = sphi 0, %s379
      %s397 = sphi 0, %s397
      %s399 = sphi 0, %s397
      %s400 = sphi 0, %s399
      %s414 = sphi 0, %s400
      %s420 = sphi 0, %s422
      %s423 = sphi 0, %s420
      %s424 = sphi 0, %s423
      %s440 = sphi 0, %s424
    $region4: #{cnn_forward.1} parent=1 // loop_header_branch
      %30 = sbr.rel (%p28) target = $region8
    $region5: #{cnn_forward.1} parent=1 // loop_body
      %s32 = ssub.s32 %s27, 1
      %s33 = ssub.s32 %s27, 2
      %s34 = sadd.s32 %s27, 1
      %s35 = ssub.s32 %s27, %s34
      %p36 = scmp.eq.s32.totalorder %s35, 0
      %s38 = sadd.s32 %s37, 1
      %s39 = scalar_select %p36, %s37, %s38
      %p42 = pneg %p36
      %p43 = scmp.eq.s32.totalorder %s27, 1
      %p44 = por %p42, %p43
      %p45 = scmp.ne.s32.totalorder %s37, %s40
      %p46 = scmp.eq.s32.totalorder %s27, 0
      %p47 = por %p45, %p46
      %p48 = scmp.ne.s32.totalorder %s37, %s40
      %p49 = scmp.eq.s32.totalorder %s32, 1
      %p50 = por %p48, %p49
      %p51 = scmp.ne.s32.totalorder %s40, %s41
      %p52 = scmp.eq.s32.totalorder %s32, 0
      %p53 = por %p51, %p52
      %p54 = scmp.ne.s32.totalorder %s40, %s41
      %p55 = scmp.eq.s32.totalorder %s33, 1
      %p56 = por %p54, %p55
      %p58 = scmp.ne.s32.totalorder %s41, %s57
      %p59 = scmp.eq.s32.totalorder %s33, 0
      %p60 = por %p58, %p59
      %s62 = sadd.s32 %s61, 1
      %p65 = scmp.eq.s32.totalorder %s27, 1
      %p66 = scmp.ne.s32.totalorder %s61, %s63
      %p67 = scmp.eq.s32.totalorder %s27, 0
      %p68 = por %p66, %p67
      %p69 = scmp.ne.s32.totalorder %s61, %s63
      %p70 = scmp.eq.s32.totalorder %s32, 1
      %p71 = por %p69, %p70
      %p72 = scmp.ne.s32.totalorder %s63, %s64
      %p73 = scmp.eq.s32.totalorder %s32, 0
      %p74 = por %p72, %p73
      %p75 = scmp.ne.s32.totalorder %s63, %s64
      %p76 = scmp.eq.s32.totalorder %s33, 1
      %p77 = por %p75, %p76
      %p79 = scmp.ne.s32.totalorder %s64, %s78
      %p80 = scmp.eq.s32.totalorder %s33, 0
      %p81 = por %p79, %p80
      %s83 = sadd.s32 %s82, 1
      %p86 = scmp.eq.s32.totalorder %s27, 1
      %p87 = scmp.ne.s32.totalorder %s82, %s84
      %p88 = scmp.eq.s32.totalorder %s27, 0
      %p89 = por %p87, %p88
      %p90 = scmp.ne.s32.totalorder %s82, %s84
      %p91 = scmp.eq.s32.totalorder %s32, 1
      %p92 = por %p90, %p91
      %p93 = scmp.ne.s32.totalorder %s84, %s85
      %p94 = scmp.eq.s32.totalorder %s32, 0
      %p95 = por %p93, %p94
      %p96 = scmp.ne.s32.totalorder %s84, %s85
      %p97 = scmp.eq.s32.totalorder %s33, 1
      %p98 = por %p96, %p97
      %p100 = scmp.ne.s32.totalorder %s85, %s99
      %p101 = scmp.eq.s32.totalorder %s33, 0
      %p102 = por %p100, %p101
      %s104 = sadd.s32 %s103, 1
      %p107 = scmp.eq.s32.totalorder %s27, 1
      %p108 = scmp.ne.s32.totalorder %s103, %s105
      %p109 = scmp.eq.s32.totalorder %s27, 0
      %p110 = por %p108, %p109
      %p111 = scmp.ne.s32.totalorder %s103, %s105
      %p112 = scmp.eq.s32.totalorder %s32, 1
      %p113 = por %p111, %p112
      %p114 = scmp.ne.s32.totalorder %s105, %s106
      %p115 = scmp.eq.s32.totalorder %s32, 0
      %p116 = por %p114, %p115
      %p117 = scmp.ne.s32.totalorder %s105, %s106
      %p118 = scmp.eq.s32.totalorder %s33, 1
      %p119 = por %p117, %p118
      %p121 = scmp.ne.s32.totalorder %s106, %s120
      %p122 = scmp.eq.s32.totalorder %s33, 0
      %p123 = por %p121, %p122
      %s125 = sadd.s32 %s124, 1
      %p128 = scmp.eq.s32.totalorder %s27, 1
      %p129 = scmp.ne.s32.totalorder %s124, %s126
      %p130 = scmp.eq.s32.totalorder %s27, 0
      %p131 = por %p129, %p130
      %p132 = scmp.ne.s32.totalorder %s124, %s126
      %p133 = scmp.eq.s32.totalorder %s32, 1
      %p134 = por %p132, %p133
      %p135 = scmp.ne.s32.totalorder %s126, %s127
      %p136 = scmp.eq.s32.totalorder %s32, 0
      %p137 = por %p135, %p136
      %p138 = scmp.ne.s32.totalorder %s126, %s127
      %p139 = scmp.eq.s32.totalorder %s33, 1
      %p140 = por %p138, %p139
      %p142 = scmp.ne.s32.totalorder %s127, %s141
      %p143 = scmp.eq.s32.totalorder %s33, 0
      %p144 = por %p142, %p143
      %s146 = sadd.s32 %s145, 1
      %p149 = scmp.eq.s32.totalorder %s27, 1
      %p150 = scmp.ne.s32.totalorder %s145, %s147
      %p151 = scmp.eq.s32.totalorder %s27, 0
      %p152 = por %p150, %p151
      %p153 = scmp.ne.s32.totalorder %s145, %s147
      %p154 = scmp.eq.s32.totalorder %s32, 1
      %p155 = por %p153, %p154
      %p156 = scmp.ne.s32.totalorder %s147, %s148
      %p157 = scmp.eq.s32.totalorder %s32, 0
      %p158 = por %p156, %p157
      %p159 = scmp.ne.s32.totalorder %s147, %s148
      %p160 = scmp.eq.s32.totalorder %s33, 1
      %p161 = por %p159, %p160
      %p163 = scmp.ne.s32.totalorder %s148, %s162
      %p164 = scmp.eq.s32.totalorder %s33, 0
      %p165 = por %p163, %p164
      %s167 = sadd.s32 %s166, 1
      %p170 = scmp.eq.s32.totalorder %s27, 1
      %p171 = scmp.ne.s32.totalorder %s166, %s168
      %p172 = scmp.eq.s32.totalorder %s27, 0
      %p173 = por %p171, %p172
      %p174 = scmp.ne.s32.totalorder %s166, %s168
      %p175 = scmp.eq.s32.totalorder %s32, 1
      %p176 = por %p174, %p175
      %p177 = scmp.ne.s32.totalorder %s168, %s169
      %p178 = scmp.eq.s32.totalorder %s32, 0
      %p179 = por %p177, %p178
      %p180 = scmp.ne.s32.totalorder %s168, %s169
      %p181 = scmp.eq.s32.totalorder %s33, 1
      %p182 = por %p180, %p181
      %p184 = scmp.ne.s32.totalorder %s169, %s183
      %p185 = scmp.eq.s32.totalorder %s33, 0
      %p186 = por %p184, %p185
      %s188 = sadd.s32 %s187, 1
      %p191 = scmp.eq.s32.totalorder %s27, 1
      %p192 = scmp.ne.s32.totalorder %s187, %s189
      %p193 = scmp.eq.s32.totalorder %s27, 0
      %p194 = por %p192, %p193
      %p195 = scmp.ne.s32.totalorder %s187, %s189
      %p196 = scmp.eq.s32.totalorder %s32, 1
      %p197 = por %p195, %p196
      %p198 = scmp.ne.s32.totalorder %s189, %s190
      %p199 = scmp.eq.s32.totalorder %s32, 0
      %p200 = por %p198, %p199
      %p201 = scmp.ne.s32.totalorder %s189, %s190
      %p202 = scmp.eq.s32.totalorder %s33, 1
      %p203 = por %p201, %p202
      %p205 = scmp.ne.s32.totalorder %s190, %s204
      %p206 = scmp.eq.s32.totalorder %s33, 0
      %p207 = por %p205, %p206
      %s209 = sadd.s32 %s208, 1
      %p212 = scmp.eq.s32.totalorder %s27, 1
      %p213 = scmp.ne.s32.totalorder %s208, %s210
      %p214 = scmp.eq.s32.totalorder %s27, 0
      %p215 = por %p213, %p214
      %p216 = scmp.ne.s32.totalorder %s208, %s210
      %p217 = scmp.eq.s32.totalorder %s32, 1
      %p218 = por %p216, %p217
      %p219 = scmp.ne.s32.totalorder %s210, %s211
      %p220 = scmp.eq.s32.totalorder %s32, 0
      %p221 = por %p219, %p220
      %p222 = scmp.ne.s32.totalorder %s210, %s211
      %p223 = scmp.eq.s32.totalorder %s33, 1
      %p224 = por %p222, %p223
      %p226 = scmp.ne.s32.totalorder %s211, %s225
      %p227 = scmp.eq.s32.totalorder %s33, 0
      %p228 = por %p226, %p227
      %s230 = sadd.s32 %s229, 1
      %p233 = scmp.eq.s32.totalorder %s27, 1
      %p234 = scmp.ne.s32.totalorder %s229, %s231
      %p235 = scmp.eq.s32.totalorder %s27, 0
      %p236 = por %p234, %p235
      %p237 = scmp.ne.s32.totalorder %s229, %s231
      %p238 = scmp.eq.s32.totalorder %s32, 1
      %p239 = por %p237, %p238
      %p240 = scmp.ne.s32.totalorder %s231, %s232
      %p241 = scmp.eq.s32.totalorder %s32, 0
      %p242 = por %p240, %p241
      %p243 = scmp.ne.s32.totalorder %s231, %s232
      %p244 = scmp.eq.s32.totalorder %s33, 1
      %p245 = por %p243, %p244
      %p247 = scmp.ne.s32.totalorder %s232, %s246
      %p248 = scmp.eq.s32.totalorder %s33, 0
      %p249 = por %p247, %p248
      %s251 = sadd.s32 %s250, 1
      %p254 = scmp.eq.s32.totalorder %s27, 1
      %p255 = scmp.ne.s32.totalorder %s250, %s252
      %p256 = scmp.eq.s32.totalorder %s27, 0
      %p257 = por %p255, %p256
      %p258 = scmp.ne.s32.totalorder %s250, %s252
      %p259 = scmp.eq.s32.totalorder %s32, 1
      %p260 = por %p258, %p259
      %p261 = scmp.ne.s32.totalorder %s252, %s253
      %p262 = scmp.eq.s32.totalorder %s32, 0
      %p263 = por %p261, %p262
      %p264 = scmp.ne.s32.totalorder %s252, %s253
      %p265 = scmp.eq.s32.totalorder %s33, 1
      %p266 = por %p264, %p265
      %p268 = scmp.ne.s32.totalorder %s253, %s267
      %p269 = scmp.eq.s32.totalorder %s33, 0
      %p270 = por %p268, %p269
      %s272 = sadd.s32 %s271, 1
      %p275 = scmp.eq.s32.totalorder %s27, 1
      %p276 = scmp.ne.s32.totalorder %s271, %s273
      %p277 = scmp.eq.s32.totalorder %s27, 0
      %p278 = por %p276, %p277
      %p279 = scmp.ne.s32.totalorder %s271, %s273
      %p280 = scmp.eq.s32.totalorder %s32, 1
      %p281 = por %p279, %p280
      %p282 = scmp.ne.s32.totalorder %s273, %s274
      %p283 = scmp.eq.s32.totalorder %s32, 0
      %p284 = por %p282, %p283
      %p285 = scmp.ne.s32.totalorder %s273, %s274
      %p286 = scmp.eq.s32.totalorder %s33, 1
      %p287 = por %p285, %p286
      %p289 = scmp.ne.s32.totalorder %s274, %s288
      %p290 = scmp.eq.s32.totalorder %s33, 0
      %p291 = por %p289, %p290
      %s293 = sadd.s32 %s292, 1
      %p296 = scmp.eq.s32.totalorder %s27, 1
      %p297 = scmp.ne.s32.totalorder %s292, %s294
      %p298 = scmp.eq.s32.totalorder %s27, 0
      %p299 = por %p297, %p298
      %p300 = scmp.ne.s32.totalorder %s292, %s294
      %p301 = scmp.eq.s32.totalorder %s32, 1
      %p302 = por %p300, %p301
      %p303 = scmp.ne.s32.totalorder %s294, %s295
      %p304 = scmp.eq.s32.totalorder %s32, 0
      %p305 = por %p303, %p304
      %p306 = scmp.ne.s32.totalorder %s294, %s295
      %p307 = scmp.eq.s32.totalorder %s33, 1
      %p308 = por %p306, %p307
      %p310 = scmp.ne.s32.totalorder %s295, %s309
      %p311 = scmp.eq.s32.totalorder %s33, 0
      %p312 = por %p310, %p311
      %s314 = sadd.s32 %s313, 1
      %p317 = scmp.eq.s32.totalorder %s27, 1
      %p318 = scmp.ne.s32.totalorder %s313, %s315
      %p319 = scmp.eq.s32.totalorder %s27, 0
      %p320 = por %p318, %p319
      %p321 = scmp.ne.s32.totalorder %s313, %s315
      %p322 = scmp.eq.s32.totalorder %s32, 1
      %p323 = por %p321, %p322
      %p324 = scmp.ne.s32.totalorder %s315, %s316
      %p325 = scmp.eq.s32.totalorder %s32, 0
      %p326 = por %p324, %p325
      %p327 = scmp.ne.s32.totalorder %s315, %s316
      %p328 = scmp.eq.s32.totalorder %s33, 1
      %p329 = por %p327, %p328
      %p331 = scmp.ne.s32.totalorder %s316, %s330
      %p332 = scmp.eq.s32.totalorder %s33, 0
      %p333 = por %p331, %p332
      %s335 = sadd.s32 %s334, 1
      %p338 = scmp.eq.s32.totalorder %s27, 1
      %p339 = scmp.ne.s32.totalorder %s334, %s336
      %p340 = scmp.eq.s32.totalorder %s27, 0
      %p341 = por %p339, %p340
      %p342 = scmp.ne.s32.totalorder %s334, %s336
      %p343 = scmp.eq.s32.totalorder %s32, 1
      %p344 = por %p342, %p343
      %p345 = scmp.ne.s32.totalorder %s336, %s337
      %p346 = scmp.eq.s32.totalorder %s32, 0
      %p347 = por %p345, %p346
      %p348 = scmp.ne.s32.totalorder %s336, %s337
      %p349 = scmp.eq.s32.totalorder %s33, 1
      %p350 = por %p348, %p349
      %p352 = scmp.ne.s32.totalorder %s337, %s351
      %p353 = scmp.eq.s32.totalorder %s33, 0
      %p354 = por %p352, %p353
      %s356 = sadd.s32 %s355, 1
      %p359 = scmp.eq.s32.totalorder %s27, 1
      %p360 = scmp.ne.s32.totalorder %s355, %s357
      %p361 = scmp.eq.s32.totalorder %s27, 0
      %p362 = por %p360, %p361
      %p363 = scmp.ne.s32.totalorder %s355, %s357
      %p364 = scmp.eq.s32.totalorder %s32, 1
      %p365 = por %p363, %p364
      %p366 = scmp.ne.s32.totalorder %s357, %s358
      %p367 = scmp.eq.s32.totalorder %s32, 0
      %p368 = por %p366, %p367
      %p369 = scmp.ne.s32.totalorder %s357, %s358
      %p370 = scmp.eq.s32.totalorder %s33, 1
      %p371 = por %p369, %p370
      %p373 = scmp.ne.s32.totalorder %s358, %s372
      %p374 = scmp.eq.s32.totalorder %s33, 0
      %p375 = por %p373, %p374
      %s377 = sadd.s32 %s376, 1
      %p380 = scmp.eq.s32.totalorder %s27, 1
      %p381 = scmp.ne.s32.totalorder %s376, %s378
      %p382 = scmp.eq.s32.totalorder %s27, 0
      %p383 = por %p381, %p382
      %p384 = scmp.ne.s32.totalorder %s376, %s378
      %p385 = scmp.eq.s32.totalorder %s32, 1
      %p386 = por %p384, %p385
      %p387 = scmp.ne.s32.totalorder %s378, %s379
      %p388 = scmp.eq.s32.totalorder %s32, 0
      %p389 = por %p387, %p388
      %p390 = scmp.ne.s32.totalorder %s378, %s379
      %p391 = scmp.eq.s32.totalorder %s33, 1
      %p392 = por %p390, %p391
      %p394 = scmp.ne.s32.totalorder %s379, %s393
      %p395 = scmp.eq.s32.totalorder %s33, 0
      %p396 = por %p394, %p395
      %s398 = sadd.s32 %s397, 1
      %p401 = scmp.eq.s32.totalorder %s27, 1
      %p402 = scmp.ne.s32.totalorder %s397, %s399
      %p403 = scmp.eq.s32.totalorder %s27, 0
      %p404 = por %p402, %p403
      %p405 = scmp.ne.s32.totalorder %s397, %s399
      %p406 = scmp.eq.s32.totalorder %s32, 1
      %p407 = por %p405, %p406
      %p408 = scmp.ne.s32.totalorder %s399, %s400
      %p409 = scmp.eq.s32.totalorder %s32, 0
      %p410 = por %p408, %p409
      %p411 = scmp.ne.s32.totalorder %s399, %s400
      %p412 = scmp.eq.s32.totalorder %s33, 1
      %p413 = por %p411, %p412
      %p415 = scmp.ne.s32.totalorder %s400, %s414
      %p416 = scmp.eq.s32.totalorder %s33, 0
      %p417 = por %p415, %p416
      %s418 = ssub.s32 %s27, %s34
      %p419 = scmp.eq.s32.totalorder %s418, 0
      %s421 = sadd.s32 %s420, 1
      %s422 = scalar_select %p419, %s420, %s421
      %p425 = pneg %p419
      %p426 = scmp.eq.s32.totalorder %s27, 1
      %p427 = por %p425, %p426
      %p428 = scmp.ne.s32.totalorder %s420, %s423
      %p429 = scmp.eq.s32.totalorder %s27, 0
      %p430 = por %p428, %p429
      %p431 = scmp.ne.s32.totalorder %s420, %s423
      %p432 = scmp.eq.s32.totalorder %s32, 1
      %p433 = por %p431, %p432
      %p434 = scmp.ne.s32.totalorder %s423, %s424
      %p435 = scmp.eq.s32.totalorder %s32, 0
      %p436 = por %p434, %p435
      %p437 = scmp.ne.s32.totalorder %s423, %s424
      %p438 = scmp.eq.s32.totalorder %s33, 1
      %p439 = por %p437, %p438
      %p441 = scmp.ne.s32.totalorder %s424, %s440
      %p442 = scmp.eq.s32.totalorder %s33, 0
      %p443 = por %p441, %p442
      %p444 = scmp.le.s32.totalorder 1, %s27
      %p445 = scmp.lt.s32.totalorder %s27, 3
      %p446 = pnand %p444, %p445
      %p447 = pneg %p446
      // Predicated region
      $region9: #{cnn_forward.1} parent=5 // pred_check
        _
      $region10: #{cnn_forward.1} parent=5 // pred_check_branch
        %449 = sbr.rel (%p446) target = $region12
      $region11: #{cnn_forward.1} parent=5 // pred_region
        %s450 = ssub.s32 %s27, 1
        // Predicated region
        $region13: #{cnn_forward.1} parent=11 // pred_check
          %p451 = pneg %p74
        $region14: #{cnn_forward.1} parent=11 // pred_check_branch
          %453 = sbr.rel (%p451) target = $region16
        $region15: #{cnn_forward.1} parent=11 // pred_region
          _
        $region16: #{cnn_forward.1} parent=11 // pred_fallthru
          _
        // Predicated region
        $region17: #{cnn_forward.1} parent=11 // pred_check
          %p454 = pneg %p95
        $region18: #{cnn_forward.1} parent=11 // pred_check_branch
          %456 = sbr.rel (%p454) target = $region20
        $region19: #{cnn_forward.1} parent=11 // pred_region
          _
        $region20: #{cnn_forward.1} parent=11 // pred_fallthru
          _
        // Predicated region
        $region21: #{cnn_forward.1} parent=11 // pred_check
          %p457 = pneg %p116
        $region22: #{cnn_forward.1} parent=11 // pred_check_branch
          %459 = sbr.rel (%p457) target = $region24
        $region23: #{cnn_forward.1} parent=11 // pred_region
          _
        $region24: #{cnn_forward.1} parent=11 // pred_fallthru
          _
        // Predicated region
        $region25: #{cnn_forward.1} parent=11 // pred_check
          %p460 = pneg %p137
        $region26: #{cnn_forward.1} parent=11 // pred_check_branch
          %462 = sbr.rel (%p460) target = $region28
        $region27: #{cnn_forward.1} parent=11 // pred_region
          _
        $region28: #{cnn_forward.1} parent=11 // pred_fallthru
          _
        // Predicated region
        $region29: #{cnn_forward.1} parent=11 // pred_check
          %p463 = pneg %p158
        $region30: #{cnn_forward.1} parent=11 // pred_check_branch
          %465 = sbr.rel (%p463) target = $region32
        $region31: #{cnn_forward.1} parent=11 // pred_region
          _
        $region32: #{cnn_forward.1} parent=11 // pred_fallthru
          _
        // Predicated region
        $region33: #{cnn_forward.1} parent=11 // pred_check
          %p466 = pneg %p179
        $region34: #{cnn_forward.1} parent=11 // pred_check_branch
          %468 = sbr.rel (%p466) target = $region36
        $region35: #{cnn_forward.1} parent=11 // pred_region
          _
        $region36: #{cnn_forward.1} parent=11 // pred_fallthru
          _
        // Predicated region
        $region37: #{cnn_forward.1} parent=11 // pred_check
          %p469 = pneg %p200
        $region38: #{cnn_forward.1} parent=11 // pred_check_branch
          %471 = sbr.rel (%p469) target = $region40
        $region39: #{cnn_forward.1} parent=11 // pred_region
          _
        $region40: #{cnn_forward.1} parent=11 // pred_fallthru
          _
        // Predicated region
        $region41: #{cnn_forward.1} parent=11 // pred_check
          %p472 = pneg %p221
        $region42: #{cnn_forward.1} parent=11 // pred_check_branch
          %474 = sbr.rel (%p472) target = $region44
        $region43: #{cnn_forward.1} parent=11 // pred_region
          _
        $region44: #{cnn_forward.1} parent=11 // pred_fallthru
          _
        // Predicated region
        $region45: #{cnn_forward.1} parent=11 // pred_check
          %p475 = pneg %p242
        $region46: #{cnn_forward.1} parent=11 // pred_check_branch
          %477 = sbr.rel (%p475) target = $region48
        $region47: #{cnn_forward.1} parent=11 // pred_region
          _
        $region48: #{cnn_forward.1} parent=11 // pred_fallthru
          _
        // Predicated region
        $region49: #{cnn_forward.1} parent=11 // pred_check
          %p478 = pneg %p263
        $region50: #{cnn_forward.1} parent=11 // pred_check_branch
          %480 = sbr.rel (%p478) target = $region52
        $region51: #{cnn_forward.1} parent=11 // pred_region
          _
        $region52: #{cnn_forward.1} parent=11 // pred_fallthru
          _
        // Predicated region
        $region53: #{cnn_forward.1} parent=11 // pred_check
          %p481 = pneg %p284
        $region54: #{cnn_forward.1} parent=11 // pred_check_branch
          %483 = sbr.rel (%p481) target = $region56
        $region55: #{cnn_forward.1} parent=11 // pred_region
          _
        $region56: #{cnn_forward.1} parent=11 // pred_fallthru
          _
        // Predicated region
        $region57: #{cnn_forward.1} parent=11 // pred_check
          %p484 = pneg %p305
        $region58: #{cnn_forward.1} parent=11 // pred_check_branch
          %486 = sbr.rel (%p484) target = $region60
        $region59: #{cnn_forward.1} parent=11 // pred_region
          _
        $region60: #{cnn_forward.1} parent=11 // pred_fallthru
          _
        // Predicated region
        $region61: #{cnn_forward.1} parent=11 // pred_check
          %p487 = pneg %p326
        $region62: #{cnn_forward.1} parent=11 // pred_check_branch
          %489 = sbr.rel (%p487) target = $region64
        $region63: #{cnn_forward.1} parent=11 // pred_region
          _
        $region64: #{cnn_forward.1} parent=11 // pred_fallthru
          _
        // Predicated region
        $region65: #{cnn_forward.1} parent=11 // pred_check
          %p490 = pneg %p347
        $region66: #{cnn_forward.1} parent=11 // pred_check_branch
          %492 = sbr.rel (%p490) target = $region68
        $region67: #{cnn_forward.1} parent=11 // pred_region
          _
        $region68: #{cnn_forward.1} parent=11 // pred_fallthru
          _
        // Predicated region
        $region69: #{cnn_forward.1} parent=11 // pred_check
          %p493 = pneg %p368
        $region70: #{cnn_forward.1} parent=11 // pred_check_branch
          %495 = sbr.rel (%p493) target = $region72
        $region71: #{cnn_forward.1} parent=11 // pred_region
          _
        $region72: #{cnn_forward.1} parent=11 // pred_fallthru
          _
        // Predicated region
        $region73: #{cnn_forward.1} parent=11 // pred_check
          %p496 = pneg %p389
        $region74: #{cnn_forward.1} parent=11 // pred_check_branch
          %498 = sbr.rel (%p496) target = $region76
        $region75: #{cnn_forward.1} parent=11 // pred_region
          _
        $region76: #{cnn_forward.1} parent=11 // pred_fallthru
          _
        // Predicated region
        $region77: #{cnn_forward.1} parent=11 // pred_check
          %p499 = pneg %p410
        $region78: #{cnn_forward.1} parent=11 // pred_check_branch
          %501 = sbr.rel (%p499) target = $region80
        $region79: #{cnn_forward.1} parent=11 // pred_region
          _
        $region80: #{cnn_forward.1} parent=11 // pred_fallthru
          _
      $region12: #{cnn_forward.1} parent=5 // pred_fallthru
        _
      %p502 = scmp.lt.s32.totalorder %s27, 2
      // Predicated region
      $region81: #{cnn_forward.1} parent=5 // pred_check
        %p503 = pneg %p502
      $region82: #{cnn_forward.1} parent=5 // pred_check_branch
        %505 = sbr.rel (%p503) target = $region84
      $region83: #{cnn_forward.1} parent=5 // pred_region
        // Predicated region
        $region85: #{cnn_forward.1} parent=83 // pred_check
          %p506 = pneg %p47
        $region86: #{cnn_forward.1} parent=83 // pred_check_branch
          %508 = sbr.rel (%p506) target = $region88
        $region87: #{cnn_forward.1} parent=83 // pred_region
          %p509 = scmp.lt.s32.totalorder %s27, 1
          %s510 = scalar_select %p509, %s27, 1
          %s511 = smul.addr %s510, 8
          %s512 = smul.addr %s511, 4
          %s513 = scalar_lea.vmem %s0, %s512
        $region88: #{cnn_forward.1} parent=83 // pred_fallthru
          _
      $region84: #{cnn_forward.1} parent=5 // pred_fallthru
        _
      %p514 = scmp.le.s32.totalorder 1, %s27
      %p515 = scmp.lt.s32.totalorder %s27, 3
      %p516 = pnand %p514, %p515
      %p517 = pneg %p516
      // Predicated region
      $region89: #{cnn_forward.1} parent=5 // pred_check
        _
      $region90: #{cnn_forward.1} parent=5 // pred_check_branch
        %519 = sbr.rel (%p516) target = $region92
      $region91: #{cnn_forward.1} parent=5 // pred_region
        %s520 = ssub.s32 %s27, 1
        %p521 = scmp.lt.s32.totalorder %s32, 1
        %s522 = scalar_select %p521, %s32, 1
        %s523 = smul.addr %s522, 8
        %s524 = smul.addr %s523, 4
        %s525 = scalar_lea.vmem %s0, %s524
        %p526 = pneg %p53
        %p527 = pneg %p50
        %p528 = pneg %p74
        %p529 = pneg %p71
        %p530 = pneg %p95
        %p531 = pneg %p92
        %p532 = pneg %p116
        %p533 = pneg %p113
        %p534 = pneg %p137
        %p535 = pneg %p134
        %p536 = pneg %p158
        %p537 = pneg %p155
        %p538 = pneg %p179
        %p539 = pneg %p176
        %p540 = pneg %p200
        %p541 = pneg %p197
        %p542 = pneg %p221
        %p543 = pneg %p218
        %p544 = pneg %p242
        %p545 = pneg %p239
        %p546 = pneg %p263
        %p547 = pneg %p260
        %p548 = pneg %p284
        %p549 = pneg %p281
        %p550 = pneg %p305
        %p551 = pneg %p302
        %p552 = pneg %p326
        %p553 = pneg %p323
        %p554 = pneg %p347
        %p555 = pneg %p344
        %p556 = pneg %p368
        %p557 = pneg %p365
        %p558 = pneg %p389
        %p559 = pneg %p386
        %p560 = pneg %p410
        %p561 = pneg %p407
        %p562 = pneg %p436
        %p563 = pneg %p433
        %s564 = sand.u32 %s423, 1
        %s565 = scalar_lea.sflag [#allocation3], %s564
        %s566 = sand.u32 %s423, 1
        %s567 = smul.addr %s566, 2
        %s568 = scalar_lea.vmem [#allocation2], %s567
        %p569 = scmp.lt.s32.totalorder %s32, 1
        %s570 = scalar_select %p569, %s32, 1
        %s571 = smul.addr %s570, 8
        %s572 = smul.addr %s571, 4
        %s573 = scalar_lea.vmem %s0, %s572
        %v575 = vld [vmem:[%s573] sm:$0xf]
        %v576 = vld [vmem:[%s573 + $0x4] sm:$0xf]
        %v577 = vld [vmem:[%s573 + $0x8] sm:$0xf]
        %v578 = vld [vmem:[%s573 + $0xc] sm:$0x1]
        %v579 = vld [vmem:[%s1] sm:$0xf]
        %v580 = vld [vmem:[%s1 + $0x4] sm:$0xf]
        %v581 = vld [vmem:[%s1 + $0x8] sm:$0xf]
        %v582 = vld [vmem:[%s1 + $0xc] sm:$0xf]
        %v583 = vld [vmem:[%s1 + $0x10] sm:$0xf]
        %v584 = vld [vmem:[%s2] sm:$0x1]
        %v586 = vperm.slane %v584, 0
        %v592 = vunpack.c.l.b16 %v575
        %v593 = vunpack.c.l.b16 %v576
        %v594 = vunpack.c.l.b16 %v577
        %v595 = vunpack.c.l.b16 %v578
        %v596 = vpack.c.b16 %v593, %v592
        %v597 = vpack.c.b16 %v595, %v594
        %v603 = vunpack.c.l.b16 %v579
        %v604 = vunpack.c.l.b16 %v580
        %v605 = vunpack.c.l.b16 %v581
        %v606 = vunpack.c.l.b16 %v582
        %v607 = vunpack.c.l.b16 %v583
        %v608 = vpack.c.b16 %v604, %v603
        %v609 = vpack.c.b16 %v606, %v605
        %v610 = vpack.c.b16 %v607, %v607
        %vm613 = vcmask 326656
        %v615 = vsel %vm613, %v596, 0
        %v618 = vsel %vm613, %v597, 0
        %vm620 = vcmask 1043456
        %v622 = vsel %vm620, %v610, 0
        %624 = vmatpush.bf16.msra.mxu0 0
        %625 = vmatpush.bf16.msra.mxu0 0
        %626 = vmatpush.bf16.msra.mxu0 0
        %627 = vmatpush.bf16.msra.mxu0 0
        %628 = vmatpush.bf16.msra.mxu0 0
        %629 = vmatpush.bf16.msra.mxu0 %v622
        %630 = vmatpush.bf16.msra.mxu0 %v609
        %631 = vmatpush.bf16.msra.mxu0 %v608
        %632 = vmatmul.bf16.gmra.mxu0 %v615
        %v633 = vpop.f32.mrf.mxu0
        %v634 = vadd.f32 %v586, %v633
        %v635 = vpop.f32.mrf.mxu0
        %v636 = vadd.f32 %v586, %v635
        %637 = vmatmul.bf16.gmra.mxu0 %v618
        %v638 = vpop.f32.mrf.mxu0
        %v639 = vadd.f32 %v586, %v638
        %v640 = vpop.f32.mrf.mxu0
        %v641 = vadd.f32 %v586, %v640
        %642 = vdwg.mxu0
        %v643 = vmul.f32 %v634, %v634
        %v644 = vmul.f32 %v636, %v636
        %v645 = vmul.f32 %v639, %v639
        %v646 = vmul.f32 %v641, %v641
        %v647 = vmul.f32 %v634, %v643
        %v648 = vmul.f32 %v636, %v644
        %v649 = vmul.f32 %v639, %v645
        %v650 = vmul.f32 %v641, %v646
        %v651 = vmul.f32 %v647, 0.044715
        %v652 = vmul.f32 %v648, 0.044715
        %v653 = vmul.f32 %v649, 0.044715
        %v654 = vmul.f32 %v650, 0.044715
        %v655 = vadd.f32 %v634, %v651
        %v656 = vadd.f32 %v636, %v652
        %v657 = vadd.f32 %v639, %v653
        %v658 = vadd.f32 %v641, %v654
        %v659 = vmul.f32 %v655, 0.7978846
        %v660 = vmul.f32 %v656, 0.7978846
        %v661 = vmul.f32 %v657, 0.7978846
        %v662 = vmul.f32 %v658, 0.7978846
        %v663 = vtanh.pop %v659
        %v664 = vtanh.pop %v660
        %v665 = vtanh.pop %v661
        %v666 = vtanh.pop %v662
        %v667 = vadd.f32 %v663, 1.0
        %v668 = vadd.f32 %v664, 1.0
        %v669 = vadd.f32 %v665, 1.0
        %v670 = vadd.f32 %v666, 1.0
        %v671 = vmul.f32 %v667, 0.5
        %v672 = vmul.f32 %v668, 0.5
        %v673 = vmul.f32 %v669, 0.5
        %v674 = vmul.f32 %v670, 0.5
        %v675 = vmul.f32 %v634, %v671
        %v676 = vmul.f32 %v636, %v672
        %v677 = vmul.f32 %v639, %v673
        %v678 = vmul.f32 %v641, %v674
        %vm682 = vcmask 1046528
        %v683 = vrot.slane %v675, 1
        %v684 = vrot.slane %v676, 1
        %v685 = vsel %vm682, %v683, %v684
        %v686 = vrot.slane %v677, 1
        %v687 = vsel %vm682, %v684, %v686
        %688 = vrot.lane.b32.xlu0 %v685, 16
        %v689 = vpop.permute.xlu0 %688
        %690 = vrot.lane.b32.xlu0 %v687, 16
        %v691 = vpop.permute.xlu0 %690
        %692 = vrot.lane.b32.xlu0 %v686, 16
        %v693 = vpop.permute.xlu0 %692
        %vm697 = vcmask 1045504
        %v698 = vrot.slane %v675, 2
        %v699 = vrot.slane %v676, 2
        %v700 = vsel %vm697, %v698, %v699
        %v701 = vrot.slane %v677, 2
        %v702 = vsel %vm697, %v699, %v701
        %703 = vrot.lane.b32.xlu0 %v700, 32
        %v704 = vpop.permute.xlu0 %703
        %705 = vrot.lane.b32.xlu0 %v702, 32
        %v706 = vpop.permute.xlu0 %705
        %707 = vrot.lane.b32.xlu0 %v701, 32
        %v708 = vpop.permute.xlu0 %707
        %vm712 = vcmask 1044480
        %v713 = vrot.slane %v675, 3
        %v714 = vrot.slane %v676, 3
        %v715 = vsel %vm712, %v713, %v714
        %v716 = vrot.slane %v677, 3
        %v717 = vsel %vm712, %v714, %v716
        %718 = vrot.lane.b32.xlu0 %v715, 48
        %v719 = vpop.permute.xlu0 %718
        %720 = vrot.lane.b32.xlu0 %v717, 48
        %v721 = vpop.permute.xlu0 %720
        %722 = vrot.lane.b32.xlu0 %v716, 48
        %v723 = vpop.permute.xlu0 %722
        %v728 = vrot.slane %v675, 4
        %v729 = vrot.slane %v676, 4
        %v730 = vsel %vm620, %v728, %v729
        %v731 = vrot.slane %v677, 4
        %v732 = vsel %vm620, %v729, %v731
        %v733 = vrot.slane %v678, 4
        %v734 = vsel %vm620, %v731, %v733
        %735 = vrot.lane.b32.xlu0 %v730, 64
        %v736 = vpop.permute.xlu0 %735
        %737 = vrot.lane.b32.xlu0 %v732, 64
        %v738 = vpop.permute.xlu0 %737
        %739 = vrot.lane.b32.xlu0 %v734, 64
        %v740 = vpop.permute.xlu0 %739
        %vm744 = vcmask 130048
        %v745 = vsel %vm744, %v675, %v689
        %v746 = vsel %vm744, %v676, %v691
        %v747 = vsel %vm744, %v677, %v693
        %vm748 = vcmask 261120
        %v749 = vsel %vm748, %v745, %v704
        %v750 = vsel %vm748, %v746, %v706
        %v751 = vsel %vm748, %v747, %v708
        %vm752 = vcmask 392192
        %v753 = vsel %vm752, %v749, %v719
        %v754 = vsel %vm752, %v750, %v721
        %v755 = vsel %vm752, %v751, %v723
        %vm756 = vcmask 523264
        %v757 = vsel %vm756, %v753, %v736
        %v758 = vsel %vm756, %v754, %v738
        %v759 = vsel %vm756, %v755, %v740
        %v760 = vpack.c.bf16 %v758, %v757
        %v761 = vpack.c.bf16 %v759, %v759
        %v762 = vld [vmem:[%s3] sm:$0xf]
        %v763 = vld [vmem:[%s3 + $0x4] sm:$0xf]
        %v764 = vld [vmem:[%s3 + $0x8] sm:$0xf]
        %v765 = vld [vmem:[%s3 + $0xc] sm:$0xf]
        %v766 = vld [vmem:[%s3 + $0x10] sm:$0xf]
        %v767 = vld [vmem:[%s3 + $0x14] sm:$0xf]
        %v768 = vld [vmem:[%s3 + $0x18] sm:$0xf]
        %v769 = vld [vmem:[%s3 + $0x1c] sm:$0xf]
        %v770 = vld [vmem:[%s3 + $0x20] sm:$0xf]
        %v771 = vld [vmem:[%s3 + $0x24] sm:$0xf]
        %v772 = vld [vmem:[%s4] sm:$0x1]
        %v774 = vperm.slane %v772, 0
        %v786 = vunpack.c.l.b16 %v762
        %v787 = vunpack.c.l.b16 %v763
        %v788 = vunpack.c.l.b16 %v764
        %v789 = vunpack.c.l.b16 %v765
        %v790 = vunpack.c.l.b16 %v766
        %v791 = vunpack.c.l.b16 %v767
        %v792 = vunpack.c.l.b16 %v768
        %v793 = vunpack.c.l.b16 %v769
        %v794 = vunpack.c.l.b16 %v770
        %v795 = vunpack.c.l.b16 %v771
        %v796 = vpack.c.b16 %v787, %v786
        %v797 = vpack.c.b16 %v789, %v788
        %v798 = vpack.c.b16 %v791, %v790
        %v799 = vpack.c.b16 %v793, %v792
        %v800 = vpack.c.b16 %v795, %v794
        %vm806 = vcmask 654336
        %v808 = vsel %vm806, %v760, 0
        %v811 = vsel %vm806, %v761, 0
        %813 = vmatpush.bf16.msra.mxu0 0
        %814 = vmatpush.bf16.msra.mxu0 0
        %815 = vmatpush.bf16.msra.mxu0 0
        %816 = vmatpush.bf16.msra.mxu0 %v800
        %817 = vmatpush.bf16.msra.mxu0 %v799
        %818 = vmatpush.bf16.msra.mxu0 %v798
        %819 = vmatpush.bf16.msra.mxu0 %v797
        %820 = vmatpush.bf16.msra.mxu0 %v796
        %821 = vmatmul.bf16.gmra.mxu0 %v808
        %v822 = vpop.f32.mrf.mxu0
        %v823 = vadd.f32 %v774, %v822
        %v824 = vpop.f32.mrf.mxu0
        %v825 = vadd.f32 %v774, %v824
        %826 = vmatmul.bf16.gmra.mxu0 %v811
        %v827 = vpop.f32.mrf.mxu0
        %v828 = vadd.f32 %v774, %v827
        %v829 = vpop.f32.mrf.mxu0
        %830 = vdwg.mxu0
        %v831 = vmul.f32 %v823, %v823
        %v832 = vmul.f32 %v825, %v825
        %v833 = vmul.f32 %v828, %v828
        %v834 = vmul.f32 %v823, %v831
        %v835 = vmul.f32 %v825, %v832
        %v836 = vmul.f32 %v828, %v833
        %v837 = vmul.f32 %v834, 0.044715
        %v838 = vmul.f32 %v835, 0.044715
        %v839 = vmul.f32 %v836, 0.044715
        %v840 = vadd.f32 %v823, %v837
        %v841 = vadd.f32 %v825, %v838
        %v842 = vadd.f32 %v828, %v839
        %v843 = vmul.f32 %v840, 0.7978846
        %v844 = vmul.f32 %v841, 0.7978846
        %v845 = vmul.f32 %v842, 0.7978846
        %v846 = vtanh.pop %v843
        %v847 = vtanh.pop %v844
        %v848 = vtanh.pop %v845
        %v849 = vadd.f32 %v846, 1.0
        %v850 = vadd.f32 %v847, 1.0
        %v851 = vadd.f32 %v848, 1.0
        %v852 = vmul.f32 %v849, 0.5
        %v853 = vmul.f32 %v850, 0.5
        %v854 = vmul.f32 %v851, 0.5
        %v855 = vmul.f32 %v823, %v852
        %v856 = vmul.f32 %v825, %v853
        %v857 = vmul.f32 %v828, %v854
        %v861 = vrot.slane %v855, 1
        %v862 = vrot.slane %v856, 1
        %v863 = vsel %vm682, %v861, %v862
        %v864 = vrot.slane %v857, 1
        %v865 = vsel %vm682, %v862, %v864
        %866 = vrot.lane.b32.xlu0 %v863, 32
        %v867 = vpop.permute.xlu0 %866
        %868 = vrot.lane.b32.xlu0 %v865, 32
        %v869 = vpop.permute.xlu0 %868
        %870 = vrot.lane.b32.xlu0 %v864, 32
        %v871 = vpop.permute.xlu0 %870
        %v875 = vrot.slane %v855, 2
        %v876 = vrot.slane %v856, 2
        %v877 = vsel %vm697, %v875, %v876
        %v878 = vrot.slane %v857, 2
        %v879 = vsel %vm697, %v876, %v878
        %880 = vrot.lane.b32.xlu0 %v877, 64
        %v881 = vpop.permute.xlu0 %880
        %882 = vrot.lane.b32.xlu0 %v879, 64
        %v883 = vpop.permute.xlu0 %882
        %884 = vrot.lane.b32.xlu0 %v878, 64
        %v885 = vpop.permute.xlu0 %884
        %v889 = vsel %vm748, %v855, %v867
        %v890 = vsel %vm748, %v856, %v869
        %v891 = vsel %vm748, %v857, %v871
        %v892 = vsel %vm756, %v889, %v881
        %v893 = vsel %vm756, %v890, %v883
        %v894 = vsel %vm756, %v891, %v885
        %v895 = vpack.c.bf16 %v893, %v892
        %v896 = vpack.c.bf16 %v894, %v894
        %v897 = vld [vmem:[%s5] sm:$0xf]
        %v898 = vld [vmem:[%s5 + $0x4] sm:$0xf]
        %v899 = vld [vmem:[%s5 + $0x8] sm:$0xf]
        %v900 = vld [vmem:[%s5 + $0xc] sm:$0xf]
        %v901 = vld [vmem:[%s5 + $0x10] sm:$0xf]
        %v902 = vld [vmem:[%s5 + $0x14] sm:$0xf]
        %v903 = vld [vmem:[%s5 + $0x18] sm:$0xf]
        %v904 = vld [vmem:[%s5 + $0x1c] sm:$0xf]
        %v905 = vld [vmem:[%s5 + $0x20] sm:$0xf]
        %v906 = vld [vmem:[%s5 + $0x24] sm:$0xf]
        %v907 = vld [vmem:[%s5 + $0x28] sm:$0xf]
        %v908 = vld [vmem:[%s5 + $0x2c] sm:$0xf]
        %v909 = vld [vmem:[%s6] sm:$0x1]
        %v911 = vperm.slane %v909, 0
        %v925 = vunpack.c.l.b16 %v897
        %v926 = vunpack.c.l.b16 %v898
        %v927 = vunpack.c.l.b16 %v899
        %v928 = vunpack.c.l.b16 %v900
        %v929 = vunpack.c.l.b16 %v901
        %v930 = vunpack.c.l.b16 %v902
        %v931 = vunpack.c.l.b16 %v903
        %v932 = vunpack.c.l.b16 %v904
        %v933 = vunpack.c.l.b16 %v905
        %v934 = vunpack.c.l.b16 %v906
        %v935 = vunpack.c.l.b16 %v907
        %v936 = vunpack.c.l.b16 %v908
        %v937 = vpack.c.b16 %v926, %v925
        %v938 = vpack.c.b16 %v928, %v927
        %v939 = vpack.c.b16 %v930, %v929
        %v940 = vpack.c.b16 %v932, %v931
        %v941 = vpack.c.b16 %v934, %v933
        %v942 = vpack.c.b16 %v936, %v935
        %vm949 = vcmask 785408
        %v951 = vsel %vm949, %v895, 0
        %v954 = vsel %vm949, %v896, 0
        %956 = vmatpush.bf16.msra.mxu0 0
        %957 = vmatpush.bf16.msra.mxu0 0
        %958 = vmatpush.bf16.msra.mxu0 %v942
        %959 = vmatpush.bf16.msra.mxu0 %v941
        %960 = vmatpush.bf16.msra.mxu0 %v940
        %961 = vmatpush.bf16.msra.mxu0 %v939
        %962 = vmatpush.bf16.msra.mxu0 %v938
        %963 = vmatpush.bf16.msra.mxu0 %v937
        %964 = vmatmul.bf16.gmra.mxu0 %v951
        %v965 = vpop.f32.mrf.mxu0
        %v966 = vadd.f32 %v911, %v965
        %v967 = vpop.f32.mrf.mxu0
        %v968 = vadd.f32 %v911, %v967
        %969 = vmatmul.bf16.gmra.mxu0 %v954
        %v970 = vpop.f32.mrf.mxu0
        %v971 = vadd.f32 %v911, %v970
        %v972 = vpop.f32.mrf.mxu0
        %973 = vdwg.mxu0
        %v974 = vmul.f32 %v966, %v966
        %v975 = vmul.f32 %v968, %v968
        %v976 = vmul.f32 %v971, %v971
        %v977 = vmul.f32 %v966, %v974
        %v978 = vmul.f32 %v968, %v975
        %v979 = vmul.f32 %v971, %v976
        %v980 = vmul.f32 %v977, 0.044715
        %v981 = vmul.f32 %v978, 0.044715
        %v982 = vmul.f32 %v979, 0.044715
        %v983 = vadd.f32 %v966, %v980
        %v984 = vadd.f32 %v968, %v981
        %v985 = vadd.f32 %v971, %v982
        %v986 = vmul.f32 %v983, 0.7978846
        %v987 = vmul.f32 %v984, 0.7978846
        %v988 = vmul.f32 %v985, 0.7978846
        %v989 = vtanh.pop %v986
        %v990 = vtanh.pop %v987
        %v991 = vtanh.pop %v988
        %v992 = vadd.f32 %v989, 1.0
        %v993 = vadd.f32 %v990, 1.0
        %v994 = vadd.f32 %v991, 1.0
        %v995 = vmul.f32 %v992, 0.5
        %v996 = vmul.f32 %v993, 0.5
        %v997 = vmul.f32 %v994, 0.5
        %v998 = vmul.f32 %v966, %v995
        %v999 = vmul.f32 %v968, %v996
        %v1000 = vmul.f32 %v971, %v997
        %v1004 = vrot.slane %v998, 1
        %v1005 = vrot.slane %v999, 1
        %v1006 = vsel %vm682, %v1004, %v1005
        %v1007 = vrot.slane %v1000, 1
        %v1008 = vsel %vm682, %v1005, %v1007
        %1009 = vrot.lane.b32.xlu0 %v1006, 64
        %v1010 = vpop.permute.xlu0 %1009
        %1011 = vrot.lane.b32.xlu0 %v1008, 64
        %v1012 = vpop.permute.xlu0 %1011
        %1013 = vrot.lane.b32.xlu0 %v1007, 64
        %v1014 = vpop.permute.xlu0 %1013
        %v1018 = vrot.slane %v998, 2
        %v1019 = vrot.slane %v999, 2
        %v1020 = vsel %vm697, %v1018, %v1019
        %v1021 = vrot.slane %v1000, 2
        %v1022 = vsel %vm697, %v1019, %v1021
        %v1026 = vsel %vm756, %v998, %v1010
        %v1027 = vsel %vm756, %v999, %v1012
        %v1028 = vsel %vm756, %v1000, %v1014
        %v1029 = vpack.c.bf16 %v1027, %v1026
        %v1030 = vpack.c.bf16 %v1022, %v1020
        %v1031 = vpack.c.bf16 %v1028, %v1028
        %v1032 = vpack.c.bf16 %v1021, %v1021
        %v1033 = vld [vmem:[%s7] sm:$0xf]
        %v1034 = vld [vmem:[%s7 + $0x4] sm:$0xf]
        %v1035 = vld [vmem:[%s7 + $0x8] sm:$0xf]
        %v1036 = vld [vmem:[%s7 + $0xc] sm:$0xf]
        %v1037 = vld [vmem:[%s7 + $0x10] sm:$0xf]
        %v1038 = vld [vmem:[%s7 + $0x14] sm:$0xf]
        %v1039 = vld [vmem:[%s7 + $0x18] sm:$0xf]
        %v1040 = vld [vmem:[%s7 + $0x1c] sm:$0xf]
        %v1041 = vld [vmem:[%s7 + $0x20] sm:$0xf]
        %v1042 = vld [vmem:[%s7 + $0x24] sm:$0xf]
        %v1043 = vld [vmem:[%s7 + $0x28] sm:$0xf]
        %v1044 = vld [vmem:[%s7 + $0x2c] sm:$0xf]
        %v1045 = vld [vmem:[%s7 + $0x30] sm:$0xf]
        %v1046 = vld [vmem:[%s7 + $0x34] sm:$0xf]
        %v1047 = vld [vmem:[%s7 + $0x38] sm:$0xf]
        %v1048 = vld [vmem:[%s7 + $0x3c] sm:$0xf]
        %v1049 = vld [vmem:[%s7 + $0x40] sm:$0xf]
        %v1050 = vld [vmem:[%s7 + $0x44] sm:$0xf]
        %v1051 = vld [vmem:[%s7 + $0x48] sm:$0xf]
        %v1052 = vld [vmem:[%s7 + $0x4c] sm:$0xf]
        %v1053 = vld [vmem:[%s7 + $0x50] sm:$0xf]
        %v1054 = vld [vmem:[%s7 + $0x54] sm:$0xf]
        %v1055 = vld [vmem:[%s7 + $0x58] sm:$0xf]
        %v1056 = vld [vmem:[%s7 + $0x5c] sm:$0xf]
        %v1057 = vld [vmem:[%s8] sm:$0x1]
        %v1059 = vperm.slane %v1057, 0
        %v1085 = vunpack.c.l.b16 %v1033
        %v1086 = vunpack.c.l.b16 %v1034
        %v1087 = vunpack.c.l.b16 %v1035
        %v1088 = vunpack.c.l.b16 %v1036
        %v1089 = vunpack.c.l.b16 %v1037
        %v1090 = vunpack.c.l.b16 %v1038
        %v1091 = vunpack.c.l.b16 %v1039
        %v1092 = vunpack.c.l.b16 %v1040
        %v1093 = vunpack.c.l.b16 %v1041
        %v1094 = vunpack.c.l.b16 %v1042
        %v1095 = vunpack.c.l.b16 %v1043
        %v1096 = vunpack.c.l.b16 %v1044
        %v1097 = vunpack.c.l.b16 %v1045
        %v1098 = vunpack.c.l.b16 %v1046
        %v1099 = vunpack.c.l.b16 %v1047
        %v1100 = vunpack.c.l.b16 %v1048
        %v1101 = vunpack.c.l.b16 %v1049
        %v1102 = vunpack.c.l.b16 %v1050
        %v1103 = vunpack.c.l.b16 %v1051
        %v1104 = vunpack.c.l.b16 %v1052
        %v1105 = vunpack.c.l.b16 %v1053
        %v1106 = vunpack.c.l.b16 %v1054
        %v1107 = vunpack.c.l.b16 %v1055
        %v1108 = vunpack.c.l.b16 %v1056
        %v1109 = vpack.c.b16 %v1086, %v1085
        %v1110 = vpack.c.b16 %v1088, %v1087
        %v1111 = vpack.c.b16 %v1090, %v1089
        %v1112 = vpack.c.b16 %v1092, %v1091
        %v1113 = vpack.c.b16 %v1094, %v1093
        %v1114 = vpack.c.b16 %v1096, %v1095
        %v1115 = vpack.c.b16 %v1098, %v1097
        %v1116 = vpack.c.b16 %v1100, %v1099
        %v1117 = vpack.c.b16 %v1102, %v1101
        %v1118 = vpack.c.b16 %v1104, %v1103
        %v1119 = vpack.c.b16 %v1106, %v1105
        %v1120 = vpack.c.b16 %v1108, %v1107
        %v1134 = vsel %vm756, %v1030, 0
        %v1137 = vsel %vm756, %v1032, 0
        %1139 = vmatpush.bf16.msra.mxu0 %v1116
        %1140 = vmatpush.bf16.msra.mxu0 %v1115
        %1141 = vmatpush.bf16.msra.mxu0 %v1114
        %1142 = vmatpush.bf16.msra.mxu0 %v1113
        %1143 = vmatpush.bf16.msra.mxu0 %v1112
        %1144 = vmatpush.bf16.msra.mxu0 %v1111
        %1145 = vmatpush.bf16.msra.mxu0 %v1110
        %1146 = vmatpush.bf16.msra.mxu0 %v1109
        %1147 = vmatmul.bf16.gmra.mxu0 %v1029
        %v1148 = vpop.f32.mrf.mxu0
        %v1149 = vadd.f32 %v1059, %v1148
        %v1150 = vpop.f32.mrf.mxu0
        %v1151 = vadd.f32 %v1059, %v1150
        %1152 = vmatmul.bf16.gmra.mxu0 %v1031
        %v1153 = vpop.f32.mrf.mxu0
        %v1154 = vadd.f32 %v1059, %v1153
        %v1155 = vpop.f32.mrf.mxu0
        %1156 = vdwg.mxu0
        %1157 = vmatpush.bf16.msra.mxu0 0
        %1158 = vmatpush.bf16.msra.mxu0 0
        %1159 = vmatpush.bf16.msra.mxu0 0
        %1160 = vmatpush.bf16.msra.mxu0 0
        %1161 = vmatpush.bf16.msra.mxu0 %v1120
        %1162 = vmatpush.bf16.msra.mxu0 %v1119
        %1163 = vmatpush.bf16.msra.mxu0 %v1118
        %1164 = vmatpush.bf16.msra.mxu0 %v1117
        %1165 = vmatmul.bf16.gmra.mxu0 %v1134
        %v1166 = vpop.f32.mrf.mxu0
        %v1167 = vadd.f32 %v1149, %v1166
        %v1168 = vpop.f32.mrf.mxu0
        %v1169 = vadd.f32 %v1151, %v1168
        %1170 = vmatmul.bf16.gmra.mxu0 %v1137
        %v1171 = vpop.f32.mrf.mxu0
        %v1172 = vadd.f32 %v1154, %v1171
        %v1173 = vpop.f32.mrf.mxu0
        %1174 = vdwg.mxu0
        %v1175 = vmul.f32 %v1167, %v1167
        %v1176 = vmul.f32 %v1169, %v1169
        %v1177 = vmul.f32 %v1172, %v1172
        %v1178 = vmul.f32 %v1167, %v1175
        %v1179 = vmul.f32 %v1169, %v1176
        %v1180 = vmul.f32 %v1172, %v1177
        %v1181 = vmul.f32 %v1178, 0.044715
        %v1182 = vmul.f32 %v1179, 0.044715
        %v1183 = vmul.f32 %v1180, 0.044715
        %v1184 = vadd.f32 %v1167, %v1181
        %v1185 = vadd.f32 %v1169, %v1182
        %v1186 = vadd.f32 %v1172, %v1183
        %v1187 = vmul.f32 %v1184, 0.7978846
        %v1188 = vmul.f32 %v1185, 0.7978846
        %v1189 = vmul.f32 %v1186, 0.7978846
        %v1190 = vtanh.pop %v1187
        %v1191 = vtanh.pop %v1188
        %v1192 = vtanh.pop %v1189
        %v1193 = vadd.f32 %v1190, 1.0
        %v1194 = vadd.f32 %v1191, 1.0
        %v1195 = vadd.f32 %v1192, 1.0
        %v1196 = vmul.f32 %v1193, 0.5
        %v1197 = vmul.f32 %v1194, 0.5
        %v1198 = vmul.f32 %v1195, 0.5
        %v1199 = vmul.f32 %v1167, %v1196
        %v1200 = vmul.f32 %v1169, %v1197
        %v1201 = vmul.f32 %v1172, %v1198
        %v1204 = vrot.slane %v1199, 1
        %v1205 = vrot.slane %v1200, 1
        %v1206 = vsel %vm682, %v1204, %v1205
        %1207 = vrot.lane.b32.xlu0 %v1206, 32
        %v1208 = vpop.permute.xlu0 %1207
        %1209 = vrot.lane.b32.xlu0 %v1205, 32
        %v1210 = vpop.permute.xlu0 %1209
        %v1214 = vrot.slane %v1199, 2
        %v1215 = vrot.slane %v1200, 2
        %v1216 = vsel %vm697, %v1214, %v1215
        %v1217 = vrot.slane %v1201, 2
        %v1218 = vsel %vm697, %v1215, %v1217
        %1219 = vrot.lane.b32.xlu0 %v1216, 64
        %v1220 = vpop.permute.xlu0 %1219
        %1221 = vrot.lane.b32.xlu0 %v1218, 64
        %v1222 = vpop.permute.xlu0 %1221
        %v1225 = vsel %vm748, %v1199, %v1208
        %v1226 = vsel %vm748, %v1200, %v1210
        %v1227 = vsel %vm756, %v1225, %v1220
        %v1228 = vsel %vm756, %v1226, %v1222
        %v1229 = vpack.c.bf16 %v1228, %v1227
        %v1230 = vld [vmem:[%s9] sm:$0xf]
        %v1231 = vld [vmem:[%s9 + $0x4] sm:$0xf]
        %v1232 = vld [vmem:[%s9 + $0x8] sm:$0xf]
        %v1233 = vld [vmem:[%s9 + $0xc] sm:$0xf]
        %v1234 = vld [vmem:[%s9 + $0x10] sm:$0xf]
        %v1235 = vld [vmem:[%s9 + $0x14] sm:$0xf]
        %v1236 = vld [vmem:[%s9 + $0x18] sm:$0xf]
        %v1237 = vld [vmem:[%s9 + $0x1c] sm:$0xf]
        %v1238 = vld [vmem:[%s9 + $0x20] sm:$0xf]
        %v1239 = vld [vmem:[%s9 + $0x24] sm:$0xf]
        %v1240 = vld [vmem:[%s9 + $0x28] sm:$0xf]
        %v1241 = vld [vmem:[%s9 + $0x2c] sm:$0xf]
        %v1242 = vld [vmem:[%s10] sm:$0x1]
        %v1244 = vperm.slane %v1242, 0
        %v1258 = vunpack.c.l.b16 %v1230
        %v1259 = vunpack.c.l.b16 %v1231
        %v1260 = vunpack.c.l.b16 %v1232
        %v1261 = vunpack.c.l.b16 %v1233
        %v1262 = vunpack.c.l.b16 %v1234
        %v1263 = vunpack.c.l.b16 %v1235
        %v1264 = vunpack.c.l.b16 %v1236
        %v1265 = vunpack.c.l.b16 %v1237
        %v1266 = vunpack.c.l.b16 %v1238
        %v1267 = vunpack.c.l.b16 %v1239
        %v1268 = vunpack.c.l.b16 %v1240
        %v1269 = vunpack.c.l.b16 %v1241
        %v1270 = vpack.c.b16 %v1259, %v1258
        %v1271 = vpack.c.b16 %v1261, %v1260
        %v1272 = vpack.c.b16 %v1263, %v1262
        %v1273 = vpack.c.b16 %v1265, %v1264
        %v1274 = vpack.c.b16 %v1267, %v1266
        %v1275 = vpack.c.b16 %v1269, %v1268
        %v1283 = vsel %vm949, %v1229, 0
        %1285 = vmatpush.bf16.msra.mxu0 0
        %1286 = vmatpush.bf16.msra.mxu0 0
        %1287 = vmatpush.bf16.msra.mxu0 %v1275
        %1288 = vmatpush.bf16.msra.mxu0 %v1274
        %1289 = vmatpush.bf16.msra.mxu0 %v1273
        %1290 = vmatpush.bf16.msra.mxu0 %v1272
        %1291 = vmatpush.bf16.msra.mxu0 %v1271
        %1292 = vmatpush.bf16.msra.mxu0 %v1270
        %1293 = vmatmul.bf16.gmra.mxu0 %v1283
        %v1294 = vpop.f32.mrf.mxu0
        %v1295 = vadd.f32 %v1244, %v1294
        %v1296 = vpop.f32.mrf.mxu0
        %v1297 = vadd.f32 %v1244, %v1296
        %1298 = vdwg.mxu0
        %v1299 = vld [vmem:[%s11] sm:$0x3]
        %v1300 = vpack.c.bf16 %v1297, %v1295
        %vm1301 = vcmask 121856
        %v1303 = vsel %vm1301, %v1299, 0
        %vm1305 = vcmask 1047552
        %v1306 = vsel %vm682, 4294967295, 65535
        %v1307 = vsel %vm1305, %v1306, 0
        %v1309 = vand.u32 %v1300, %v1307
        %1311 = vmatpush.bf16.msra.mxu0 0
        %1312 = vmatpush.bf16.msra.mxu0 0
        %1313 = vmatpush.bf16.msra.mxu0 0
        %1314 = vmatpush.bf16.msra.mxu0 0
        %1315 = vmatpush.bf16.msra.mxu0 0
        %1316 = vmatpush.bf16.msra.mxu0 0
        %1317 = vmatpush.bf16.msra.mxu0 0
        %1318 = vmatpush.bf16.msra.mxu0 %v1309
        %1319 = vmatmul.bf16.gmra.mxu0 %v1303
        %v1320 = vpop.f32.mrf.mxu0
        %v1321 = vadd.f32 0.0, %v1320
        %v1322 = vpop.f32.mrf.mxu0
        %1323 = vdwg.mxu0
        %v1325 = vrot.slane %v1321, 1
        %1326 = vrot.lane.b32.xlu0 %v1325, 32
        %v1327 = vpop.permute.xlu0 %1326
        %v1329 = vrot.slane %v1321, 2
        %1330 = vrot.lane.b32.xlu0 %v1329, 64
        %v1331 = vpop.permute.xlu0 %1330
        %v1333 = vrot.slane %v1321, 3
        %1334 = vrot.lane.b32.xlu0 %v1333, 96
        %v1335 = vpop.permute.xlu0 %1334
        %v1337 = vsel %vm748, %v1321, %v1327
        %v1338 = vsel %vm756, %v1337, %v1331
        %v1339 = vsel %vm949, %v1338, %v1335
        %s1340 = scalar_lea.vmem %s573, 16
        %v1341 = vld [vmem:[%s1340] sm:$0xf]
        %v1342 = vld [vmem:[%s1340 + $0x4] sm:$0xf]
        %v1343 = vld [vmem:[%s1340 + $0x8] sm:$0xf]
        %v1344 = vld [vmem:[%s1340 + $0xc] sm:$0x1]
        %v1349 = vunpack.c.l.b16 %v1341
        %v1350 = vunpack.c.l.b16 %v1342
        %v1351 = vunpack.c.l.b16 %v1343
        %v1352 = vunpack.c.l.b16 %v1344
        %v1353 = vpack.c.b16 %v1350, %v1349
        %v1354 = vpack.c.b16 %v1352, %v1351
        %v1356 = vsel %vm613, %v1353, 0
        %v1359 = vsel %vm613, %v1354, 0
        %1361 = vmatpush.bf16.msra.mxu0 0
        %1362 = vmatpush.bf16.msra.mxu0 0
        %1363 = vmatpush.bf16.msra.mxu0 0
        %1364 = vmatpush.bf16.msra.mxu0 0
        %1365 = vmatpush.bf16.msra.mxu0 0
        %1366 = vmatpush.bf16.msra.mxu0 %v622
        %1367 = vmatpush.bf16.msra.mxu0 %v609
        %1368 = vmatpush.bf16.msra.mxu0 %v608
        %1369 = vmatmul.bf16.gmra.mxu0 %v1356
        %v1370 = vpop.f32.mrf.mxu0
        %v1371 = vadd.f32 %v586, %v1370
        %v1372 = vpop.f32.mrf.mxu0
        %v1373 = vadd.f32 %v586, %v1372
        %1374 = vmatmul.bf16.gmra.mxu0 %v1359
        %v1375 = vpop.f32.mrf.mxu0
        %v1376 = vadd.f32 %v586, %v1375
        %v1377 = vpop.f32.mrf.mxu0
        %v1378 = vadd.f32 %v586, %v1377
        %1379 = vdwg.mxu0
        %v1380 = vmul.f32 %v1371, %v1371
        %v1381 = vmul.f32 %v1373, %v1373
        %v1382 = vmul.f32 %v1376, %v1376
        %v1383 = vmul.f32 %v1378, %v1378
        %v1384 = vmul.f32 %v1371, %v1380
        %v1385 = vmul.f32 %v1373, %v1381
        %v1386 = vmul.f32 %v1376, %v1382
        %v1387 = vmul.f32 %v1378, %v1383
        %v1388 = vmul.f32 %v1384, 0.044715
        %v1389 = vmul.f32 %v1385, 0.044715
        %v1390 = vmul.f32 %v1386, 0.044715
        %v1391 = vmul.f32 %v1387, 0.044715
        %v1392 = vadd.f32 %v1371, %v1388
        %v1393 = vadd.f32 %v1373, %v1389
        %v1394 = vadd.f32 %v1376, %v1390
        %v1395 = vadd.f32 %v1378, %v1391
        %v1396 = vmul.f32 %v1392, 0.7978846
        %v1397 = vmul.f32 %v1393, 0.7978846
        %v1398 = vmul.f32 %v1394, 0.7978846
        %v1399 = vmul.f32 %v1395, 0.7978846
        %v1400 = vtanh.pop %v1396
        %v1401 = vtanh.pop %v1397
        %v1402 = vtanh.pop %v1398
        %v1403 = vtanh.pop %v1399
        %v1404 = vadd.f32 %v1400, 1.0
        %v1405 = vadd.f32 %v1401, 1.0
        %v1406 = vadd.f32 %v1402, 1.0
        %v1407 = vadd.f32 %v1403, 1.0
        %v1408 = vmul.f32 %v1404, 0.5
        %v1409 = vmul.f32 %v1405, 0.5
        %v1410 = vmul.f32 %v1406, 0.5
        %v1411 = vmul.f32 %v1407, 0.5
        %v1412 = vmul.f32 %v1371, %v1408
        %v1413 = vmul.f32 %v1373, %v1409
        %v1414 = vmul.f32 %v1376, %v1410
        %v1415 = vmul.f32 %v1378, %v1411
        %v1419 = vrot.slane %v1412, 1
        %v1420 = vrot.slane %v1413, 1
        %v1421 = vsel %vm682, %v1419, %v1420
        %v1422 = vrot.slane %v1414, 1
        %v1423 = vsel %vm682, %v1420, %v1422
        %1424 = vrot.lane.b32.xlu0 %v1421, 16
        %v1425 = vpop.permute.xlu0 %1424
        %1426 = vrot.lane.b32.xlu0 %v1423, 16
        %v1427 = vpop.permute.xlu0 %1426
        %1428 = vrot.lane.b32.xlu0 %v1422, 16
        %v1429 = vpop.permute.xlu0 %1428
        %v1433 = vrot.slane %v1412, 2
        %v1434 = vrot.slane %v1413, 2
        %v1435 = vsel %vm697, %v1433, %v1434
        %v1436 = vrot.slane %v1414, 2
        %v1437 = vsel %vm697, %v1434, %v1436
        %1438 = vrot.lane.b32.xlu0 %v1435, 32
        %v1439 = vpop.permute.xlu0 %1438
        %1440 = vrot.lane.b32.xlu0 %v1437, 32
        %v1441 = vpop.permute.xlu0 %1440
        %1442 = vrot.lane.b32.xlu0 %v1436, 32
        %v1443 = vpop.permute.xlu0 %1442
        %v1447 = vrot.slane %v1412, 3
        %v1448 = vrot.slane %v1413, 3
        %v1449 = vsel %vm712, %v1447, %v1448
        %v1450 = vrot.slane %v1414, 3
        %v1451 = vsel %vm712, %v1448, %v1450
        %1452 = vrot.lane.b32.xlu0 %v1449, 48
        %v1453 = vpop.permute.xlu0 %1452
        %1454 = vrot.lane.b32.xlu0 %v1451, 48
        %v1455 = vpop.permute.xlu0 %1454
        %1456 = vrot.lane.b32.xlu0 %v1450, 48
        %v1457 = vpop.permute.xlu0 %1456
        %v1462 = vrot.slane %v1412, 4
        %v1463 = vrot.slane %v1413, 4
        %v1464 = vsel %vm620, %v1462, %v1463
        %v1465 = vrot.slane %v1414, 4
        %v1466 = vsel %vm620, %v1463, %v1465
        %v1467 = vrot.slane %v1415, 4
        %v1468 = vsel %vm620, %v1465, %v1467
        %1469 = vrot.lane.b32.xlu0 %v1464, 64
        %v1470 = vpop.permute.xlu0 %1469
        %1471 = vrot.lane.b32.xlu0 %v1466, 64
        %v1472 = vpop.permute.xlu0 %1471
        %1473 = vrot.lane.b32.xlu0 %v1468, 64
        %v1474 = vpop.permute.xlu0 %1473
        %v1478 = vsel %vm744, %v1412, %v1425
        %v1479 = vsel %vm744, %v1413, %v1427
        %v1480 = vsel %vm744, %v1414, %v1429
        %v1481 = vsel %vm748, %v1478, %v1439
        %v1482 = vsel %vm748, %v1479, %v1441
        %v1483 = vsel %vm748, %v1480, %v1443
        %v1484 = vsel %vm752, %v1481, %v1453
        %v1485 = vsel %vm752, %v1482, %v1455
        %v1486 = vsel %vm752, %v1483, %v1457
        %v1487 = vsel %vm756, %v1484, %v1470
        %v1488 = vsel %vm756, %v1485, %v1472
        %v1489 = vsel %vm756, %v1486, %v1474
        %v1490 = vpack.c.bf16 %v1488, %v1487
        %v1491 = vpack.c.bf16 %v1489, %v1489
        %v1493 = vsel %vm806, %v1490, 0
        %v1496 = vsel %vm806, %v1491, 0
        %1498 = vmatpush.bf16.msra.mxu0 0
        %1499 = vmatpush.bf16.msra.mxu0 0
        %1500 = vmatpush.bf16.msra.mxu0 0
        %1501 = vmatpush.bf16.msra.mxu0 %v800
        %1502 = vmatpush.bf16.msra.mxu0 %v799
        %1503 = vmatpush.bf16.msra.mxu0 %v798
        %1504 = vmatpush.bf16.msra.mxu0 %v797
        %1505 = vmatpush.bf16.msra.mxu0 %v796
        %1506 = vmatmul.bf16.gmra.mxu0 %v1493
        %v1507 = vpop.f32.mrf.mxu0
        %v1508 = vadd.f32 %v774, %v1507
        %v1509 = vpop.f32.mrf.mxu0
        %v1510 = vadd.f32 %v774, %v1509
        %1511 = vmatmul.bf16.gmra.mxu0 %v1496
        %v1512 = vpop.f32.mrf.mxu0
        %v1513 = vadd.f32 %v774, %v1512
        %v1514 = vpop.f32.mrf.mxu0
        %1515 = vdwg.mxu0
        %v1516 = vmul.f32 %v1508, %v1508
        %v1517 = vmul.f32 %v1510, %v1510
        %v1518 = vmul.f32 %v1513, %v1513
        %v1519 = vmul.f32 %v1508, %v1516
        %v1520 = vmul.f32 %v1510, %v1517
        %v1521 = vmul.f32 %v1513, %v1518
        %v1522 = vmul.f32 %v1519, 0.044715
        %v1523 = vmul.f32 %v1520, 0.044715
        %v1524 = vmul.f32 %v1521, 0.044715
        %v1525 = vadd.f32 %v1508, %v1522
        %v1526 = vadd.f32 %v1510, %v1523
        %v1527 = vadd.f32 %v1513, %v1524
        %v1528 = vmul.f32 %v1525, 0.7978846
        %v1529 = vmul.f32 %v1526, 0.7978846
        %v1530 = vmul.f32 %v1527, 0.7978846
        %v1531 = vtanh.pop %v1528
        %v1532 = vtanh.pop %v1529
        %v1533 = vtanh.pop %v1530
        %v1534 = vadd.f32 %v1531, 1.0
        %v1535 = vadd.f32 %v1532, 1.0
        %v1536 = vadd.f32 %v1533, 1.0
        %v1537 = vmul.f32 %v1534, 0.5
        %v1538 = vmul.f32 %v1535, 0.5
        %v1539 = vmul.f32 %v1536, 0.5
        %v1540 = vmul.f32 %v1508, %v1537
        %v1541 = vmul.f32 %v1510, %v1538
        %v1542 = vmul.f32 %v1513, %v1539
        %v1546 = vrot.slane %v1540, 1
        %v1547 = vrot.slane %v1541, 1
        %v1548 = vsel %vm682, %v1546, %v1547
        %v1549 = vrot.slane %v1542, 1
        %v1550 = vsel %vm682, %v1547, %v1549
        %1551 = vrot.lane.b32.xlu0 %v1548, 32
        %v1552 = vpop.permute.xlu0 %1551
        %1553 = vrot.lane.b32.xlu0 %v1550, 32
        %v1554 = vpop.permute.xlu0 %1553
        %1555 = vrot.lane.b32.xlu0 %v1549, 32
        %v1556 = vpop.permute.xlu0 %1555
        %v1560 = vrot.slane %v1540, 2
        %v1561 = vrot.slane %v1541, 2
        %v1562 = vsel %vm697, %v1560, %v1561
        %v1563 = vrot.slane %v1542, 2
        %v1564 = vsel %vm697, %v1561, %v1563
        %1565 = vrot.lane.b32.xlu0 %v1562, 64
        %v1566 = vpop.permute.xlu0 %1565
        %1567 = vrot.lane.b32.xlu0 %v1564, 64
        %v1568 = vpop.permute.xlu0 %1567
        %1569 = vrot.lane.b32.xlu0 %v1563, 64
        %v1570 = vpop.permute.xlu0 %1569
        %v1574 = vsel %vm748, %v1540, %v1552
        %v1575 = vsel %vm748, %v1541, %v1554
        %v1576 = vsel %vm748, %v1542, %v1556
        %v1577 = vsel %vm756, %v1574, %v1566
        %v1578 = vsel %vm756, %v1575, %v1568
        %v1579 = vsel %vm756, %v1576, %v1570
        %v1580 = vpack.c.bf16 %v1578, %v1577
        %v1581 = vpack.c.bf16 %v1579, %v1579
        %v1583 = vsel %vm949, %v1580, 0
        %v1586 = vsel %vm949, %v1581, 0
        %1588 = vmatpush.bf16.msra.mxu0 0
        %1589 = vmatpush.bf16.msra.mxu0 0
        %1590 = vmatpush.bf16.msra.mxu0 %v942
        %1591 = vmatpush.bf16.msra.mxu0 %v941
        %1592 = vmatpush.bf16.msra.mxu0 %v940
        %1593 = vmatpush.bf16.msra.mxu0 %v939
        %1594 = vmatpush.bf16.msra.mxu0 %v938
        %1595 = vmatpush.bf16.msra.mxu0 %v937
        %1596 = vmatmul.bf16.gmra.mxu0 %v1583
        %v1597 = vpop.f32.mrf.mxu0
        %v1598 = vadd.f32 %v911, %v1597
        %v1599 = vpop.f32.mrf.mxu0
        %v1600 = vadd.f32 %v911, %v1599
        %1601 = vmatmul.bf16.gmra.mxu0 %v1586
        %v1602 = vpop.f32.mrf.mxu0
        %v1603 = vadd.f32 %v911, %v1602
        %v1604 = vpop.f32.mrf.mxu0
        %1605 = vdwg.mxu0
        %v1606 = vmul.f32 %v1598, %v1598
        %v1607 = vmul.f32 %v1600, %v1600
        %v1608 = vmul.f32 %v1603, %v1603
        %v1609 = vmul.f32 %v1598, %v1606
        %v1610 = vmul.f32 %v1600, %v1607
        %v1611 = vmul.f32 %v1603, %v1608
        %v1612 = vmul.f32 %v1609, 0.044715
        %v1613 = vmul.f32 %v1610, 0.044715
        %v1614 = vmul.f32 %v1611, 0.044715
        %v1615 = vadd.f32 %v1598, %v1612
        %v1616 = vadd.f32 %v1600, %v1613
        %v1617 = vadd.f32 %v1603, %v1614
        %v1618 = vmul.f32 %v1615, 0.7978846
        %v1619 = vmul.f32 %v1616, 0.7978846
        %v1620 = vmul.f32 %v1617, 0.7978846
        %v1621 = vtanh.pop %v1618
        %v1622 = vtanh.pop %v1619
        %v1623 = vtanh.pop %v1620
        %v1624 = vadd.f32 %v1621, 1.0
        %v1625 = vadd.f32 %v1622, 1.0
        %v1626 = vadd.f32 %v1623, 1.0
        %v1627 = vmul.f32 %v1624, 0.5
        %v1628 = vmul.f32 %v1625, 0.5
        %v1629 = vmul.f32 %v1626, 0.5
        %v1630 = vmul.f32 %v1598, %v1627
        %v1631 = vmul.f32 %v1600, %v1628
        %v1632 = vmul.f32 %v1603, %v1629
        %v1636 = vrot.slane %v1630, 1
        %v1637 = vrot.slane %v1631, 1
        %v1638 = vsel %vm682, %v1636, %v1637
        %v1639 = vrot.slane %v1632, 1
        %v1640 = vsel %vm682, %v1637, %v1639
        %1641 = vrot.lane.b32.xlu0 %v1638, 64
        %v1642 = vpop.permute.xlu0 %1641
        %1643 = vrot.lane.b32.xlu0 %v1640, 64
        %v1644 = vpop.permute.xlu0 %1643
        %1645 = vrot.lane.b32.xlu0 %v1639, 64
        %v1646 = vpop.permute.xlu0 %1645
        %v1650 = vrot.slane %v1630, 2
        %v1651 = vrot.slane %v1631, 2
        %v1652 = vsel %vm697, %v1650, %v1651
        %v1653 = vrot.slane %v1632, 2
        %v1654 = vsel %vm697, %v1651, %v1653
        %v1658 = vsel %vm756, %v1630, %v1642
        %v1659 = vsel %vm756, %v1631, %v1644
        %v1660 = vsel %vm756, %v1632, %v1646
        %v1661 = vpack.c.bf16 %v1659, %v1658
        %v1662 = vpack.c.bf16 %v1654, %v1652
        %v1663 = vpack.c.bf16 %v1660, %v1660
        %v1664 = vpack.c.bf16 %v1653, %v1653
        %v1666 = vsel %vm756, %v1662, 0
        %v1669 = vsel %vm756, %v1664, 0
        %1671 = vmatpush.bf16.msra.mxu0 %v1116
        %1672 = vmatpush.bf16.msra.mxu0 %v1115
        %1673 = vmatpush.bf16.msra.mxu0 %v1114
        %1674 = vmatpush.bf16.msra.mxu0 %v1113
        %1675 = vmatpush.bf16.msra.mxu0 %v1112
        %1676 = vmatpush.bf16.msra.mxu0 %v1111
        %1677 = vmatpush.bf16.msra.mxu0 %v1110
        %1678 = vmatpush.bf16.msra.mxu0 %v1109
        %1679 = vmatmul.bf16.gmra.mxu0 %v1661
        %v1680 = vpop.f32.mrf.mxu0
        %v1681 = vadd.f32 %v1059, %v1680
        %v1682 = vpop.f32.mrf.mxu0
        %v1683 = vadd.f32 %v1059, %v1682
        %1684 = vmatmul.bf16.gmra.mxu0 %v1663
        %v1685 = vpop.f32.mrf.mxu0
        %v1686 = vadd.f32 %v1059, %v1685
        %v1687 = vpop.f32.mrf.mxu0
        %1688 = vdwg.mxu0
        %1689 = vmatpush.bf16.msra.mxu0 0
        %1690 = vmatpush.bf16.msra.mxu0 0
        %1691 = vmatpush.bf16.msra.mxu0 0
        %1692 = vmatpush.bf16.msra.mxu0 0
        %1693 = vmatpush.bf16.msra.mxu0 %v1120
        %1694 = vmatpush.bf16.msra.mxu0 %v1119
        %1695 = vmatpush.bf16.msra.mxu0 %v1118
        %1696 = vmatpush.bf16.msra.mxu0 %v1117
        %1697 = vmatmul.bf16.gmra.mxu0 %v1666
        %v1698 = vpop.f32.mrf.mxu0
        %v1699 = vadd.f32 %v1681, %v1698
        %v1700 = vpop.f32.mrf.mxu0
        %v1701 = vadd.f32 %v1683, %v1700
        %1702 = vmatmul.bf16.gmra.mxu0 %v1669
        %v1703 = vpop.f32.mrf.mxu0
        %v1704 = vadd.f32 %v1686, %v1703
        %v1705 = vpop.f32.mrf.mxu0
        %1706 = vdwg.mxu0
        %v1707 = vmul.f32 %v1699, %v1699
        %v1708 = vmul.f32 %v1701, %v1701
        %v1709 = vmul.f32 %v1704, %v1704
        %v1710 = vmul.f32 %v1699, %v1707
        %v1711 = vmul.f32 %v1701, %v1708
        %v1712 = vmul.f32 %v1704, %v1709
        %v1713 = vmul.f32 %v1710, 0.044715
        %v1714 = vmul.f32 %v1711, 0.044715
        %v1715 = vmul.f32 %v1712, 0.044715
        %v1716 = vadd.f32 %v1699, %v1713
        %v1717 = vadd.f32 %v1701, %v1714
        %v1718 = vadd.f32 %v1704, %v1715
        %v1719 = vmul.f32 %v1716, 0.7978846
        %v1720 = vmul.f32 %v1717, 0.7978846
        %v1721 = vmul.f32 %v1718, 0.7978846
        %v1722 = vtanh.pop %v1719
        %v1723 = vtanh.pop %v1720
        %v1724 = vtanh.pop %v1721
        %v1725 = vadd.f32 %v1722, 1.0
        %v1726 = vadd.f32 %v1723, 1.0
        %v1727 = vadd.f32 %v1724, 1.0
        %v1728 = vmul.f32 %v1725, 0.5
        %v1729 = vmul.f32 %v1726, 0.5
        %v1730 = vmul.f32 %v1727, 0.5
        %v1731 = vmul.f32 %v1699, %v1728
        %v1732 = vmul.f32 %v1701, %v1729
        %v1733 = vmul.f32 %v1704, %v1730
        %v1736 = vrot.slane %v1731, 1
        %v1737 = vrot.slane %v1732, 1
        %v1738 = vsel %vm682, %v1736, %v1737
        %1739 = vrot.lane.b32.xlu0 %v1738, 32
        %v1740 = vpop.permute.xlu0 %1739
        %1741 = vrot.lane.b32.xlu0 %v1737, 32
        %v1742 = vpop.permute.xlu0 %1741
        %v1746 = vrot.slane %v1731, 2
        %v1747 = vrot.slane %v1732, 2
        %v1748 = vsel %vm697, %v1746, %v1747
        %v1749 = vrot.slane %v1733, 2
        %v1750 = vsel %vm697, %v1747, %v1749
        %1751 = vrot.lane.b32.xlu0 %v1748, 64
        %v1752 = vpop.permute.xlu0 %1751
        %1753 = vrot.lane.b32.xlu0 %v1750, 64
        %v1754 = vpop.permute.xlu0 %1753
        %v1757 = vsel %vm748, %v1731, %v1740
        %v1758 = vsel %vm748, %v1732, %v1742
        %v1759 = vsel %vm756, %v1757, %v1752
        %v1760 = vsel %vm756, %v1758, %v1754
        %v1761 = vpack.c.bf16 %v1760, %v1759
        %v1763 = vsel %vm949, %v1761, 0
        %1765 = vmatpush.bf16.msra.mxu0 0
        %1766 = vmatpush.bf16.msra.mxu0 0
        %1767 = vmatpush.bf16.msra.mxu0 %v1275
        %1768 = vmatpush.bf16.msra.mxu0 %v1274
        %1769 = vmatpush.bf16.msra.mxu0 %v1273
        %1770 = vmatpush.bf16.msra.mxu0 %v1272
        %1771 = vmatpush.bf16.msra.mxu0 %v1271
        %1772 = vmatpush.bf16.msra.mxu0 %v1270
        %1773 = vmatmul.bf16.gmra.mxu0 %v1763
        %v1774 = vpop.f32.mrf.mxu0
        %v1775 = vadd.f32 %v1244, %v1774
        %v1776 = vpop.f32.mrf.mxu0
        %v1777 = vadd.f32 %v1244, %v1776
        %1778 = vdwg.mxu0
        %v1779 = vpack.c.bf16 %v1777, %v1775
        %v1781 = vand.u32 %v1779, %v1307
        %1783 = vmatpush.bf16.msra.mxu0 0
        %1784 = vmatpush.bf16.msra.mxu0 0
        %1785 = vmatpush.bf16.msra.mxu0 0
        %1786 = vmatpush.bf16.msra.mxu0 0
        %1787 = vmatpush.bf16.msra.mxu0 0
        %1788 = vmatpush.bf16.msra.mxu0 0
        %1789 = vmatpush.bf16.msra.mxu0 0
        %1790 = vmatpush.bf16.msra.mxu0 %v1781
        %1791 = vmatmul.bf16.gmra.mxu0 %v1303
        %v1792 = vpop.f32.mrf.mxu0
        %v1793 = vadd.f32 0.0, %v1792
        %v1794 = vpop.f32.mrf.mxu0
        %1795 = vdwg.mxu0
        %v1797 = vrot.slane %v1793, 1
        %1798 = vrot.lane.b32.xlu0 %v1797, 32
        %v1799 = vpop.permute.xlu0 %1798
        %v1801 = vrot.slane %v1793, 2
        %1802 = vrot.lane.b32.xlu0 %v1801, 64
        %v1803 = vpop.permute.xlu0 %1802
        %v1805 = vrot.slane %v1793, 3
        %1806 = vrot.lane.b32.xlu0 %v1805, 96
        %v1807 = vpop.permute.xlu0 %1806
        %v1809 = vsel %vm748, %v1793, %v1799
        %v1810 = vsel %vm756, %v1809, %v1803
        %v1811 = vsel %vm949, %v1810, %v1807
        %v1813 = vrot.slane %v1811, 7
        %vm1815 = vcmask 1040384
        %v1816 = vsel %vm1815, %v1339, %v1813
        %v1817 = vpack.c.bf16 %v1816, %v1816
        %v1818 = vld [vmem:[%s12] sm:$0xf]
        %v1819 = vld [vmem:[%s12 + $0x4] sm:$0xf]
        %v1820 = vld [vmem:[%s12 + $0x8] sm:$0xf]
        %v1821 = vld [vmem:[%s12 + $0xc] sm:$0xf]
        %v1822 = vld [vmem:[%s12 + $0x10] sm:$0xf]
        %v1823 = vld [vmem:[%s12 + $0x14] sm:$0xf]
        %v1824 = vld [vmem:[%s12 + $0x18] sm:$0xf]
        %v1825 = vld [vmem:[%s12 + $0x1c] sm:$0xf]
        %v1826 = vld [vmem:[%s12 + $0x20] sm:$0xf]
        %v1827 = vld [vmem:[%s12 + $0x24] sm:$0xf]
        %v1828 = vld [vmem:[%s12 + $0x28] sm:$0xf]
        %v1829 = vld [vmem:[%s12 + $0x2c] sm:$0xf]
        %v1830 = vld [vmem:[%s12 + $0x30] sm:$0xf]
        %v1831 = vld [vmem:[%s12 + $0x34] sm:$0xf]
        %v1832 = vld [vmem:[%s12 + $0x38] sm:$0xf]
        %v1833 = vld [vmem:[%s12 + $0x3c] sm:$0xf]
        %v1834 = vld [vmem:[%s13] sm:$0x1]
        %v1836 = vperm.slane %v1834, 0
        %v1854 = vunpack.c.l.b16 %v1818
        %v1855 = vunpack.c.l.b16 %v1819
        %v1856 = vunpack.c.l.b16 %v1820
        %v1857 = vunpack.c.l.b16 %v1821
        %v1858 = vunpack.c.l.b16 %v1822
        %v1859 = vunpack.c.l.b16 %v1823
        %v1860 = vunpack.c.l.b16 %v1824
        %v1861 = vunpack.c.l.b16 %v1825
        %v1862 = vunpack.c.l.b16 %v1826
        %v1863 = vunpack.c.l.b16 %v1827
        %v1864 = vunpack.c.l.b16 %v1828
        %v1865 = vunpack.c.l.b16 %v1829
        %v1866 = vunpack.c.l.b16 %v1830
        %v1867 = vunpack.c.l.b16 %v1831
        %v1868 = vunpack.c.l.b16 %v1832
        %v1869 = vunpack.c.l.b16 %v1833
        %v1870 = vpack.c.b16 %v1855, %v1854
        %v1871 = vpack.c.b16 %v1857, %v1856
        %v1872 = vpack.c.b16 %v1859, %v1858
        %v1873 = vpack.c.b16 %v1861, %v1860
        %v1874 = vpack.c.b16 %v1863, %v1862
        %v1875 = vpack.c.b16 %v1865, %v1864
        %v1876 = vpack.c.b16 %v1867, %v1866
        %v1877 = vpack.c.b16 %v1869, %v1868
        %1886 = vmatpush.bf16.msra.mxu0 %v1877
        %1887 = vmatpush.bf16.msra.mxu0 %v1876
        %1888 = vmatpush.bf16.msra.mxu0 %v1875
        %1889 = vmatpush.bf16.msra.mxu0 %v1874
        %1890 = vmatpush.bf16.msra.mxu0 %v1873
        %1891 = vmatpush.bf16.msra.mxu0 %v1872
        %1892 = vmatpush.bf16.msra.mxu0 %v1871
        %1893 = vmatpush.bf16.msra.mxu0 %v1870
        %1894 = vmatmul.bf16.gmra.mxu0 %v1817
        %v1895 = vpop.f32.mrf.mxu0
        %v1896 = vadd.f32 %v1836, %v1895
        %v1897 = vpop.f32.mrf.mxu0
        %1898 = vdwg.mxu0
        %v1899 = vmul.f32 %v1896, %v1896
        %v1900 = vmul.f32 %v1896, %v1899
        %v1901 = vmul.f32 %v1900, 0.044715
        %v1902 = vadd.f32 %v1896, %v1901
        %v1903 = vmul.f32 %v1902, 0.7978846
        %v1904 = vtanh.pop %v1903
        %v1905 = vadd.f32 %v1904, 1.0
        %v1906 = vmul.f32 %v1905, 0.5
        %v1907 = vmul.f32 %v1896, %v1906
        %v1908 = vpack.c.bf16 %v1907, %v1907
        %v1909 = vld [vmem:[%s14] sm:$0xf]
        %v1910 = vld [vmem:[%s14 + $0x4] sm:$0xf]
        %v1911 = vld [vmem:[%s14 + $0x8] sm:$0xf]
        %v1912 = vld [vmem:[%s14 + $0xc] sm:$0xf]
        %v1913 = vld [vmem:[%s14 + $0x10] sm:$0xf]
        %v1914 = vld [vmem:[%s14 + $0x14] sm:$0xf]
        %v1915 = vld [vmem:[%s14 + $0x18] sm:$0xf]
        %v1916 = vld [vmem:[%s14 + $0x1c] sm:$0xf]
        %v1917 = vld [vmem:[%s15] sm:$0x1]
        %v1919 = vperm.slane %v1917, 0
        %v1929 = vunpack.c.l.b16 %v1909
        %v1930 = vunpack.c.l.b16 %v1910
        %v1931 = vunpack.c.l.b16 %v1911
        %v1932 = vunpack.c.l.b16 %v1912
        %v1933 = vunpack.c.l.b16 %v1913
        %v1934 = vunpack.c.l.b16 %v1914
        %v1935 = vunpack.c.l.b16 %v1915
        %v1936 = vunpack.c.l.b16 %v1916
        %v1937 = vpack.c.b16 %v1930, %v1929
        %v1938 = vpack.c.b16 %v1932, %v1931
        %v1939 = vpack.c.b16 %v1934, %v1933
        %v1940 = vpack.c.b16 %v1936, %v1935
        %v1946 = vsel %vm756, %v1908, 0
        %1948 = vmatpush.bf16.msra.mxu0 0
        %1949 = vmatpush.bf16.msra.mxu0 0
        %1950 = vmatpush.bf16.msra.mxu0 0
        %1951 = vmatpush.bf16.msra.mxu0 0
        %1952 = vmatpush.bf16.msra.mxu0 %v1940
        %1953 = vmatpush.bf16.msra.mxu0 %v1939
        %1954 = vmatpush.bf16.msra.mxu0 %v1938
        %1955 = vmatpush.bf16.msra.mxu0 %v1937
        %1956 = vmatmul.bf16.gmra.mxu0 %v1946
        %v1957 = vpop.f32.mrf.mxu0
        %v1958 = vadd.f32 %v1919, %v1957
        %v1959 = vpop.f32.mrf.mxu0
        %1960 = vdwg.mxu0
        %v1961 = vmul.f32 %v1958, %v1958
        %v1962 = vmul.f32 %v1958, %v1961
        %v1963 = vmul.f32 %v1962, 0.044715
        %v1964 = vadd.f32 %v1958, %v1963
        %v1965 = vmul.f32 %v1964, 0.7978846
        %v1966 = vtanh.pop %v1965
        %v1967 = vadd.f32 %v1966, 1.0
        %v1968 = vmul.f32 %v1967, 0.5
        %v1969 = vmul.f32 %v1958, %v1968
        %v1970 = vpack.c.bf16 %v1969, %v1969
        %v1971 = vld [vmem:[%s16] sm:$0xf]
        %v1972 = vld [vmem:[%s16 + $0x4] sm:$0xf]
        %v1973 = vld [vmem:[%s16 + $0x8] sm:$0xf]
        %v1974 = vld [vmem:[%s16 + $0xc] sm:$0xf]
        %v1975 = vld [vmem:[%s17] sm:$0x1]
        %v1977 = vperm.slane %v1975, 0
        %v1983 = vunpack.c.l.b16 %v1971
        %v1984 = vunpack.c.l.b16 %v1972
        %v1985 = vunpack.c.l.b16 %v1973
        %v1986 = vunpack.c.l.b16 %v1974
        %v1987 = vpack.c.b16 %v1984, %v1983
        %v1988 = vpack.c.b16 %v1986, %v1985
        %v1992 = vsel %vm748, %v1970, 0
        %1994 = vmatpush.bf16.msra.mxu0 0
        %1995 = vmatpush.bf16.msra.mxu0 0
        %1996 = vmatpush.bf16.msra.mxu0 0
        %1997 = vmatpush.bf16.msra.mxu0 0
        %1998 = vmatpush.bf16.msra.mxu0 0
        %1999 = vmatpush.bf16.msra.mxu0 0
        %2000 = vmatpush.bf16.msra.mxu0 %v1988
        %2001 = vmatpush.bf16.msra.mxu0 %v1987
        %2002 = vmatmul.bf16.gmra.mxu0 %v1992
        %v2003 = vpop.f32.mrf.mxu0
        %v2004 = vadd.f32 %v1977, %v2003
        %v2005 = vpop.f32.mrf.mxu0
        %2006 = vdwg.mxu0
        %vm2007 = vcmask 58368
        %2008 = vst.msk [vmem:[%s568] sm:$0x3] %vm2007, %v2004
        %s2009 = sand.u32 %s423, 1
        %s2010 = scalar_lea.sflag [#allocation3], %s2009
        %s2011 = sand.u32 %s423, 1
        %s2012 = smul.addr %s2011, 2
        %s2013 = scalar_lea.vmem [#allocation2], %s2012
        // Predicated region
        $region93: #{cnn_forward.1} parent=91 // pred_check
          %p2014 = pneg %p433
        $region94: #{cnn_forward.1} parent=91 // pred_check_branch
          %2016 = sbr.rel (%p2014) target = $region96
        $region95: #{cnn_forward.1} parent=91 // pred_region
          %2018 = vsyncadd %s2010, 0
          %s2019 = smul.addr %s32, 2
          %s2020 = scalar_lea.hbm %s18, %s2019
          %s2022 = sshll.u32 %s2013, 4
          %s2023 = int_to_ptr.vmem [resolvable:$true] %s2022
          %s2024 = sshll.u32 %s2020, 4
          %s2025 = int_to_ptr.hbm [resolvable:$true] %s2024
          %2027 = dma.vmem_to_hbm [thread:$0]  %s2023, 32, %s2025, %s2010
        $region96: #{cnn_forward.1} parent=91 // pred_fallthru
          _
      $region92: #{cnn_forward.1} parent=5 // pred_fallthru
        _
      %p2028 = scmp.le.s32.totalorder 2, %s27
      // Predicated region
      $region97: #{cnn_forward.1} parent=5 // pred_check
        %p2029 = pneg %p2028
      $region98: #{cnn_forward.1} parent=5 // pred_check_branch
        %2031 = sbr.rel (%p2029) target = $region100
      $region99: #{cnn_forward.1} parent=5 // pred_region
        %s2032 = ssub.s32 %s27, 2
        // Predicated region
        $region101: #{cnn_forward.1} parent=99 // pred_check
          %p2033 = pneg %p439
        $region102: #{cnn_forward.1} parent=99 // pred_check_branch
          %2035 = sbr.rel (%p2033) target = $region104
        $region103: #{cnn_forward.1} parent=99 // pred_region
          %s2036 = sand.u32 %s424, 1
          %s2037 = scalar_lea.sflag [#allocation3], %s2036
          %s2038 = sand.u32 %s424, 1
          %s2039 = smul.addr %s2038, 2
          %s2040 = scalar_lea.vmem [#allocation2], %s2039
          %2042 = dma.done %s2037, 32
        $region104: #{cnn_forward.1} parent=99 // pred_fallthru
          _
      $region100: #{cnn_forward.1} parent=5 // pred_fallthru
        _
    $region6: #{cnn_forward.1} parent=1 // loop_footer
      %s31 = sadd.s32 1, %s27
    $region7: #{cnn_forward.1} parent=1 // loop_footer_branch
      %26 = sbr.rel target = $region3
    $region8: #{cnn_forward.1} parent=1 // loop_exit
      _
    %2043 = vsyncpa [#allocation3], 1
    %s2044 = scalar_lea.sflag [#allocation3], 1
    %2045 = vsyncpa %s2044, 1

</llo_original>
